<compile_context>
chip_gen: v6e
topology: v6e:2x2x1
jax: 0.10.0
libtpu: 0.0.40
codegen_flags: <defaults>
</compile_context>

<pallas_src>
import jax
import jax.numpy as jnp
from jax.experimental import pallas as pl
from jax.experimental.pallas import tpu as pltpu


# ---------------------------------------------------------------------------
# Pallas kernels: 2-D row-blocked tiles, last dim = channels (lane axis).
# ---------------------------------------------------------------------------

def _matmul_kernel(x_ref, w_ref, o_ref):
    # o = x @ w                              (shortcut conv, no activation)
    y = jnp.dot(x_ref[...], w_ref[...], preferred_element_type=jnp.float32)
    o_ref[...] = y.astype(o_ref.dtype)


def _matmul_bnrelu_kernel(x_ref, w_ref, s_ref, b_ref, o_ref):
    # o = relu((x @ w) * scale + bias)       (conv + folded BN + ReLU)
    y = jnp.dot(x_ref[...], w_ref[...], preferred_element_type=jnp.float32)
    o_ref[...] = jnp.maximum(y * s_ref[...] + b_ref[...], 0.0).astype(o_ref.dtype)


def _preact_matmul_bnrelu_kernel(x_ref, w_ref, ps_ref, pb_ref, s_ref, b_ref, o_ref):
    # o = relu((relu(x*ps + pb) @ w) * scale + bias)   (preact BNReLU fused in)
    x = jnp.maximum(x_ref[...] * ps_ref[...] + pb_ref[...], 0.0)
    y = jnp.dot(x, w_ref[...], preferred_element_type=jnp.float32)
    o_ref[...] = jnp.maximum(y * s_ref[...] + b_ref[...], 0.0).astype(o_ref.dtype)


def _matmul_add_kernel(x_ref, r_ref, w_ref, o_ref):
    # o = x @ w + residual                   (conv3 + residual add, no act)
    y = jnp.dot(x_ref[...], w_ref[...], preferred_element_type=jnp.float32)
    o_ref[...] = (y + r_ref[...].astype(jnp.float32)).astype(o_ref.dtype)


def _matmul_add_bnrelu_kernel(x_ref, r_ref, w_ref, s_ref, b_ref, o_ref):
    # o = relu((x @ w + residual) * scale + bias)   (last conv3 + add + bnlast)
    y = jnp.dot(x_ref[...], w_ref[...], preferred_element_type=jnp.float32)
    y = y + r_ref[...].astype(jnp.float32)
    o_ref[...] = jnp.maximum(y * s_ref[...] + b_ref[...], 0.0).astype(o_ref.dtype)


def _shortcut_conv1_kernel(x_ref, wsc_ref, w1_ref, s1_ref, b1_ref, sc_ref, f1_ref):
    # Two matmuls on the SAME input tile (block0 shortcut + conv1, both 1x1,
    # stride 1): one HBM read of x feeds both MXU passes.
    x = x_ref[...]
    sc = jnp.dot(x, wsc_ref[...], preferred_element_type=jnp.float32)
    sc_ref[...] = sc.astype(sc_ref.dtype)
    y = jnp.dot(x, w1_ref[...], preferred_element_type=jnp.float32)
    f1_ref[...] = jnp.maximum(y * s1_ref[...] + b1_ref[...], 0.0).astype(f1_ref.dtype)


def _bnrelu_kernel(x_ref, s_ref, b_ref, o_ref):
    # o = relu(x * scale + bias)             (standalone preact fallback)
    y = x_ref[...].astype(jnp.float32) * s_ref[...] + b_ref[...]
    o_ref[...] = jnp.maximum(y, 0.0).astype(o_ref.dtype)


# ---------------------------------------------------------------------------
# Row-blocked pallas_call wrapper (single- or multi-output).
# ---------------------------------------------------------------------------

def _round_up(x, m):
    return (x + m - 1) // m * m


# Conservative per-step working-set budget: fits the default scoped VMEM on
# v5e/v6e (32 MiB default of 128 MiB) and v7x (32 MiB default of 64 MiB),
# leaving headroom for the resident weight / scale / bias blocks.
_VMEM_ROW_BUDGET = 24 * 1024 * 1024


def _pallas_rowwise(kernel, row_ins, bcast_ins, out_cols, out_dtype,
                    flops_per_row=0):
    """Run `kernel` over large row-blocks of the (M, k) arrays in `row_ins`.

    `bcast_ins` (weights / per-channel scale & bias, all 2-D) map to the same
    block at every grid step, so the pipeline keeps them resident in VMEM.
    Kernel signature: kernel(*row_refs, *bcast_refs, *out_refs).
    `out_cols` may be an int (single output) or a list/tuple of ints.
    Rows are zero-padded to a multiple of the block size and sliced back.
    """
    multi = isinstance(out_cols, (tuple, list))
    out_cols_list = list(out_cols) if multi else [out_cols]

    M = row_ins[0].shape[0]
    itemsize = jnp.dtype(out_dtype).itemsize
    bytes_per_row = (sum(a.shape[1] for a in row_ins)
                     + sum(out_cols_list)) * itemsize

    # Largest row block whose double-buffered tiles fit the VMEM budget.
    tm = _VMEM_ROW_BUDGET // max(2 * bytes_per_row, 1)
    tm = max(8, min((tm // 8) * 8, 2048, _round_up(M, 8)))
    Mp = _round_up(M, tm)

    row_ins_p = [a if a.shape[0] == Mp
                 else jnp.pad(a, ((0, Mp - a.shape[0]), (0, 0)))
                 for a in row_ins]

    in_specs = [pl.BlockSpec((tm, a.shape[1]), lambda i: (i, 0))
                for a in row_ins_p]
    in_specs += [pl.BlockSpec(a.shape, lambda i, nd=a.ndim: (0,) * nd)
                 for a in bcast_ins]

    out_shapes = tuple(jax.ShapeDtypeStruct((Mp, c), out_dtype)
                       for c in out_cols_list)
    out_specs = tuple(pl.BlockSpec((tm, c), lambda i: (i, 0))
                      for c in out_cols_list)

    bytes_accessed = Mp * bytes_per_row + sum(
        a.size * jnp.dtype(a.dtype).itemsize for a in bcast_ins)

    outs = pl.pallas_call(
        kernel,
        out_shape=out_shapes if multi else out_shapes[0],
        grid=(Mp // tm,),
        in_specs=in_specs,
        out_specs=out_specs if multi else out_specs[0],
        compiler_params=pltpu.CompilerParams(
            dimension_semantics=("parallel",)),
        cost_estimate=pl.CostEstimate(
            flops=int(flops_per_row) * int(Mp),
            transcendentals=0,
            bytes_accessed=int(bytes_accessed)),
    )(*row_ins_p, *bcast_ins)

    if not multi:
        outs = (outs,)
    outs = tuple(o[:M] if Mp != M else o for o in outs)
    return outs if multi else outs[0]


# ---------------------------------------------------------------------------
# Conv / BN helpers (layout plumbing in the wrapper, compute in Pallas).
# ---------------------------------------------------------------------------

def _same_pad_amount(size, ksize, stride):
    # Exact SamepaddingLayer logic (computed from H, applied to H and W).
    if size % stride == 0:
        pad = max(ksize - stride, 0)
    else:
        pad = max(ksize - size % stride, 0)
    if pad % 2 == 0:
        return pad // 2, pad // 2
    return pad // 2, pad - pad // 2


def _im2col(x_nhwc, k, stride):
    # Extract k x k patches (given stride) -> (N*Ho*Wo, k*k*C) columns.
    # TODO(synk): in-kernel halo tiling would avoid the k*k input re-read;
    # kept as wrapper-side layout plumbing for robustness at arbitrary shapes.
    N, H, W, C = x_nhwc.shape
    Ho = (H - k) // stride + 1
    Wo = (W - k) // stride + 1
    patches = []
    for dy in range(k):
        for dx in range(k):
            patches.append(
                x_nhwc[:, dy:dy + stride * Ho:stride,
                       dx:dx + stride * Wo:stride, :])
    xcol = jnp.concatenate(patches, axis=-1).reshape(N * Ho * Wo, k * k * C)
    return xcol, Ho, Wo


def _conv_pallas(x_nhwc, w_hwio, stride=1, padding=((0, 0), (0, 0)),
                 scale=None, bias=None, pre_scale=None, pre_bias=None,
                 residual_flat=None):
    """conv2d (VALID after explicit padding) via im2col + Pallas MXU matmul.

    Fused epilogues:
      scale/bias            -> folded BatchNorm + ReLU
      pre_scale/pre_bias    -> preact BNReLU applied to the input (1x1 conv only)
      residual_flat         -> conv output + residual
      residual + scale/bias -> conv output + residual, then BNReLU (bnlast)
    Returns (flat_out [N*Ho*Wo, Cout], (N, Ho, Wo)).
    """
    kH, kW, Cin, Cout = w_hwio.shape
    (pad_t, pad_b), (pad_l, pad_r) = padding
    if pad_t or pad_b or pad_l or pad_r:
        x_nhwc = jnp.pad(x_nhwc, ((0, 0), (pad_t, pad_b), (pad_l, pad_r), (0, 0)))
    N = x_nhwc.shape[0]

    if kH == 1 and kW == 1:
        xs = x_nhwc[:, ::stride, ::stride, :]
        Ho, Wo = xs.shape[1], xs.shape[2]
        xcol = xs.reshape(N * Ho * Wo, Cin)
    else:
        xcol, Ho, Wo = _im2col(x_nhwc, kH, stride)

    w2d = w_hwio.reshape(kH * kW * Cin, Cout)
    flops_per_row = 2 * w2d.shape[0] * Cout

    if residual_flat is not None and scale is not None:
        out = _pallas_rowwise(
            _matmul_add_bnrelu_kernel, [xcol, residual_flat],
            [w2d, scale.reshape(1, -1), bias.reshape(1, -1)],
            Cout, x_nhwc.dtype, flops_per_row)
    elif residual_flat is not None:
        out = _pallas_rowwise(_matmul_add_kernel, [xcol, residual_flat],
                              [w2d], Cout, x_nhwc.dtype, flops_per_row)
    elif scale is not None and pre_scale is not None:
        assert kH == 1 and kW == 1  # preact fusion only valid for 1x1 conv
        out = _pallas_rowwise(
            _preact_matmul_bnrelu_kernel, [xcol],
            [w2d, pre_scale.reshape(1, -1), pre_bias.reshape(1, -1),
             scale.reshape(1, -1), bias.reshape(1, -1)],
            Cout, x_nhwc.dtype, flops_per_row)
    elif scale is not None:
        out = _pallas_rowwise(
            _matmul_bnrelu_kernel, [xcol],
            [w2d, scale.reshape(1, -1), bias.reshape(1, -1)],
            Cout, x_nhwc.dtype, flops_per_row)
    else:
        out = _pallas_rowwise(_matmul_kernel, [xcol], [w2d], Cout,
                              x_nhwc.dtype, flops_per_row)
    return out, (N, Ho, Wo)


def _shortcut_conv1_fused(x_nhwc, w_sc, w1, s1, b1):
    """block0: 1x1 shortcut conv + 1x1 conv1+BNReLU in one dual-output kernel."""
    N, H, W, Cin = x_nhwc.shape
    ch2 = w_sc.shape[-1]
    ch0 = w1.shape[-1]
    xcol = x_nhwc.reshape(N * H * W, Cin)
    flops_per_row = 2 * Cin * (ch2 + ch0)
    sc_flat, f1_flat = _pallas_rowwise(
        _shortcut_conv1_kernel, [xcol],
        [w_sc.reshape(Cin, ch2), w1.reshape(Cin, ch0),
         s1.reshape(1, -1), b1.reshape(1, -1)],
        [ch2, ch0], x_nhwc.dtype, flops_per_row)
    return (sc_flat, f1_flat), (N, H, W)


def _bnrelu_pallas(x_flat, scale, bias):
    C = x_flat.shape[1]
    return _pallas_rowwise(_bnrelu_kernel, [x_flat],
                           [scale.reshape(1, -1), bias.reshape(1, -1)],
                           C, x_flat.dtype, flops_per_row=2 * C)


# ---------------------------------------------------------------------------
# ResidualBlock forward (Pallas) and pure-JAX reference.
# ---------------------------------------------------------------------------

def residual_block_forward(x_nchw, params, ksize=(1, 3, 1), strides=1):
    """Pallas implementation of ResidualBlock.forward (eval-mode BatchNorm)."""
    x = jnp.transpose(x_nchw, (0, 2, 3, 1))            # NCHW -> NHWC
    blocks = params["blocks"]
    count = len(blocks)
    ch2 = params["shortcut_w"].shape[-1]

    if count == 0:                                       # degenerate case
        flat = _bnrelu_pallas(x.reshape(-1, x.shape[-1]),
                              params["last_s"], params["last_b"])
        return jnp.transpose(flat.reshape(x.shape), (0, 3, 1, 2))

    shortcut_flat = None
    in_feats = x
    cur_h = cur_w = None
    N = x.shape[0]

    for i, bp in enumerate(blocks):
        stride_i = strides if i == 0 else 1
        is_last = (i == count - 1)
        feats = in_feats

        fuse_pre = (i != 0) and (ksize[0] == 1)
        if i != 0 and not fuse_pre:
            # TODO(synk): standalone preact path (HoVerNet always uses 1x1
            # conv1, so the fused path below is the one exercised).
            cin_i = feats.shape[-1]
            pf = _bnrelu_pallas(feats.reshape(-1, cin_i), bp["pre_s"], bp["pre_b"])
            feats = pf.reshape(feats.shape)

        # conv1 (+ BNReLU).  For i==0 with a stride-1, 1x1 shortcut, compute
        # shortcut and conv1 from one read of x in a single dual-output kernel.
        if i == 0 and strides == 1 and ksize[0] == 1:
            (shortcut_flat, f1_flat), (N, h1, w1o) = _shortcut_conv1_fused(
                x, params["shortcut_w"], bp["w1"], bp["s1"], bp["b1"])
        else:
            if i == 0:
                shortcut_flat, _ = _conv_pallas(
                    x, params["shortcut_w"], stride=strides)
            if fuse_pre:
                f1_flat, (N, h1, w1o) = _conv_pallas(
                    feats, bp["w1"], stride=1, scale=bp["s1"], bias=bp["b1"],
                    pre_scale=bp["pre_s"], pre_bias=bp["pre_b"])
            else:
                f1_flat, (N, h1, w1o) = _conv_pallas(
                    feats, bp["w1"], stride=1, scale=bp["s1"], bias=bp["b1"])
        f1 = f1_flat.reshape(N, h1, w1o, f1_flat.shape[1])

        # conv2_pad + conv2 (+ BNReLU): TF-style 'same' padding, stride_i.
        p0, p1 = _same_pad_amount(h1, ksize[1], stride_i)
        f2_flat, (N, h2, w2o) = _conv_pallas(
            f1, bp["w2"], stride=stride_i, padding=((p0, p1), (p0, p1)),
            scale=bp["s2"], bias=bp["b2"])
        f2 = f2_flat.reshape(N, h2, w2o, f2_flat.shape[1])

        # conv3 with the residual add fused; for the final block additionally
        # fuse bnlast's BNReLU into the same epilogue.
        if is_last:
            f3_flat, (N, h3, w3o) = _conv_pallas(
                f2, bp["w3"], stride=1, residual_flat=shortcut_flat,
                scale=params["last_s"], bias=params["last_b"])
        else:
            f3_flat, (N, h3, w3o) = _conv_pallas(
                f2, bp["w3"], stride=1, residual_flat=shortcut_flat)

        in_feats = f3_flat.reshape(N, h3, w3o, ch2)
        shortcut_flat = f3_flat
        cur_h, cur_w = h3, w3o

    out = in_feats.reshape(N, cur_h, cur_w, ch2)
    return jnp.transpose(out, (0, 3, 1, 2))             # NHWC -> NCHW


def residual_block_reference(x_nchw, params, ksize=(1, 3, 1), strides=1):
    """Pure-JAX reference (lax.conv) with identical eval-mode BN semantics."""
    x = jnp.transpose(x_nchw, (0, 2, 3, 1))

    def conv(v, w, stride=1, padding=((0, 0), (0, 0))):
        return jax.lax.conv_general_dilated(
            v, w, window_strides=(stride, stride), padding=padding,
            dimension_numbers=("NHWC", "HWIO", "NHWC"),
            precision=jax.lax.Precision.HIGHEST)

    def bnrelu(v, s, b):
        return jnp.maximum(v * s + b, 0.0)

    shortcut = conv(x, params["shortcut_w"], stride=strides)
    in_feats = x
    for i, bp in enumerate(params["blocks"]):
        stride_i = strides if i == 0 else 1
        f = in_feats
        if i != 0:
            f = bnrelu(f, bp["pre_s"], bp["pre_b"])
        f = bnrelu(conv(f, bp["w1"]), bp["s1"], bp["b1"])
        p0, p1 = _same_pad_amount(f.shape[1], ksize[1], stride_i)
        f = bnrelu(conv(f, bp["w2"], stride=stride_i,
                        padding=((p0, p1), (p0, p1))), bp["s2"], bp["b2"])
        f = conv(f, bp["w3"])
        in_feats = f + shortcut
        shortcut = in_feats
    out = jnp.maximum(in_feats * params["last_s"] + params["last_b"], 0.0)
    return jnp.transpose(out, (0, 3, 1, 2))


# ---------------------------------------------------------------------------
# Parameter construction (eval-mode BN folded to per-channel scale/bias).
# ---------------------------------------------------------------------------

def _bn_affine(key, c, eps=1e-5):
    k1, k2, k3, k4 = jax.random.split(key, 4)
    gamma = 1.0 + 0.1 * jax.random.normal(k1, (c,), jnp.float32)
    beta = 0.1 * jax.random.normal(k2, (c,), jnp.float32)
    mean = 0.1 * jax.random.normal(k3, (c,), jnp.float32)
    var = jax.random.uniform(k4, (c,), jnp.float32, minval=0.5, maxval=1.5)
    scale = gamma * jax.lax.rsqrt(var + eps)
    bias = beta - mean * scale
    return scale, bias


def make_params(key, ch_in, ch, ksize, count):
    ch0, ch1, ch2 = ch
    keys = iter(jax.random.split(key, 6 * count + 4))

    def conv_w(k, shape):
        fan_in = 1
        for d in shape[:-1]:
            fan_in *= d
        return jax.random.normal(k, shape, jnp.float32) / jnp.sqrt(float(fan_in))

    params = {"shortcut_w": conv_w(next(keys), (1, 1, ch_in, ch2)), "blocks": []}
    for i in range(count):
        cin_i = ch_in if i == 0 else ch2
        bp = {}
        if i != 0:
            bp["pre_s"], bp["pre_b"] = _bn_affine(next(keys), ch2)
        bp["w1"] = conv_w(next(keys), (ksize[0], ksize[0], cin_i, ch0))
        bp["s1"], bp["b1"] = _bn_affine(next(keys), ch0)
        bp["w2"] = conv_w(next(keys), (ksize[1], ksize[1], ch0, ch1))
        bp["s2"], bp["b2"] = _bn_affine(next(keys), ch1)
        bp["w3"] = conv_w(next(keys), (ksize[2], ksize[2], ch1, ch2))
        params["blocks"].append(bp)
    params["last_s"], params["last_b"] = _bn_affine(next(keys), ch2)
    return params


if __name__ == "__main__":
    key = jax.random.PRNGKey(0)
    kx, kp = jax.random.split(key)

    N, ch_in, H, W = 2, 4, 16, 16
    ch = (4, 4, 8)
    ksize = (1, 3, 1)
    count = 2
    strides = 1

    x = jax.random.normal(kx, (N, ch_in, H, W), dtype=jnp.float32)
    params = make_params(kp, ch_in, ch, ksize, count)

    out = residual_block_forward(x, params, ksize=ksize, strides=strides)
    out = jax.block_until_ready(out)

    ref = jax.block_until_ready(
        residual_block_reference(x, params, ksize=ksize, strides=strides))

    assert out.shape == ref.shape == (N, ch[2], H, W), (out.shape, ref.shape)
    assert out.dtype == x.dtype
    max_err = float(jnp.max(jnp.abs(out - ref)))
    assert jnp.allclose(out, ref, atol=1e-3, rtol=1e-3), f"max abs err {max_err}"
    print("KERNEL_OK")
</pallas_src>

<mosaic_0001>
module attributes {stable_mosaic.version = 11 : i64} {
  func.func @_shortcut_conv1_kernel(%arg0: i32, %arg1: memref<512x4xf32, #tpu.memory_space<vmem>>, %arg2: memref<4x8xf32, #tpu.memory_space<vmem>>, %arg3: memref<4x4xf32, #tpu.memory_space<vmem>>, %arg4: memref<1x4xf32, #tpu.memory_space<vmem>>, %arg5: memref<1x4xf32, #tpu.memory_space<vmem>>, %arg6: memref<512x8xf32, #tpu.memory_space<vmem>>, %arg7: memref<512x4xf32, #tpu.memory_space<vmem>>) attributes {dimension_semantics = [#tpu.dimension_semantics<parallel>], iteration_bounds = array<i64: 1>, scalar_prefetch = 0 : i64, scratch_operands = 0 : i64, tpu.core_type = #tpu.core_type<tc>, window_params = [{transform_indices = @transform_0, window_bounds = array<i64: 512, 4>}, {pipeline_mode = #tpu.pipeline_mode<synchronous>, transform_indices = @transform_1, window_bounds = array<i64: 4, 8>}, {pipeline_mode = #tpu.pipeline_mode<synchronous>, transform_indices = @transform_2, window_bounds = array<i64: 4, 4>}, {pipeline_mode = #tpu.pipeline_mode<synchronous>, transform_indices = @transform_3, window_bounds = array<i64: 1, 4>}, {pipeline_mode = #tpu.pipeline_mode<synchronous>, transform_indices = @transform_4, window_bounds = array<i64: 1, 4>}, {transform_indices = @transform_5, window_bounds = array<i64: 512, 8>}, {transform_indices = @transform_6, window_bounds = array<i64: 512, 4>}]} {
    %c0 = arith.constant 0 : index
    %c0_0 = arith.constant 0 : index
    %0 = vector.load %arg1[%c0, %c0_0] : memref<512x4xf32, #tpu.memory_space<vmem>>, vector<512x4xf32>
    %c0_1 = arith.constant 0 : index
    %c0_2 = arith.constant 0 : index
    %1 = vector.load %arg2[%c0_1, %c0_2] : memref<4x8xf32, #tpu.memory_space<vmem>>, vector<4x8xf32>
    %cst = arith.constant dense<0.000000e+00> : vector<512x8xf32>
    %2 = tpu.matmul %0, %1, %cst {dimension_numbers = #tpu.dot_dimension_numbers<[1], [0], [0], [1], [0, 0, 1, 1], [], []>} : vector<512x4xf32>, vector<4x8xf32>, vector<512x8xf32> -> vector<512x8xf32>
    %c0_3 = arith.constant 0 : index
    %c0_4 = arith.constant 0 : index
    %3 = vector.load %arg6[%c0_3, %c0_4] : memref<512x8xf32, #tpu.memory_space<vmem>>, vector<512x8xf32>
    tpu.vector_store %arg6[%c0_3, %c0_4], %2 {strides = array<i32>} : memref<512x8xf32, #tpu.memory_space<vmem>>, vector<512x8xf32>,
    %c0_5 = arith.constant 0 : index
    %c0_6 = arith.constant 0 : index
    %4 = vector.load %arg3[%c0_5, %c0_6] : memref<4x4xf32, #tpu.memory_space<vmem>>, vector<4x4xf32>
    %cst_7 = arith.constant dense<0.000000e+00> : vector<512x4xf32>
    %5 = tpu.matmul %0, %4, %cst_7 {dimension_numbers = #tpu.dot_dimension_numbers<[1], [0], [0], [1], [0, 0, 1, 1], [], []>} : vector<512x4xf32>, vector<4x4xf32>, vector<512x4xf32> -> vector<512x4xf32>
    %c0_8 = arith.constant 0 : index
    %c0_9 = arith.constant 0 : index
    %6 = vector.load %arg4[%c0_8, %c0_9] : memref<1x4xf32, #tpu.memory_space<vmem>>, vector<1x4xf32>
    %7 = vector.broadcast %6 : vector<1x4xf32> to vector<512x4xf32>
    %8 = arith.mulf %5, %7 : vector<512x4xf32>
    %c0_10 = arith.constant 0 : index
    %c0_11 = arith.constant 0 : index
    %9 = vector.load %arg5[%c0_10, %c0_11] : memref<1x4xf32, #tpu.memory_space<vmem>>, vector<1x4xf32>
    %10 = vector.broadcast %9 : vector<1x4xf32> to vector<512x4xf32>
    %11 = arith.addf %8, %10 : vector<512x4xf32>
    %cst_12 = arith.constant 0.000000e+00 : f32
    %12 = vector.broadcast %cst_12 : f32 to vector<512x4xf32>
    %13 = arith.maximumf %11, %12 : vector<512x4xf32>
    %c0_13 = arith.constant 0 : index
    %c0_14 = arith.constant 0 : index
    %14 = vector.load %arg7[%c0_13, %c0_14] : memref<512x4xf32, #tpu.memory_space<vmem>>, vector<512x4xf32>
    tpu.vector_store %arg7[%c0_13, %c0_14], %13 {strides = array<i32>} : memref<512x4xf32, #tpu.memory_space<vmem>>, vector<512x4xf32>,
    return
  }
  func.func @transform_0(%arg0: i32) -> (i32, i32) {
    %c0_i32 = arith.constant 0 : i32
    %c0_i32_0 = arith.constant 0 : i32
    return %arg0, %c0_i32 : i32, i32
  }
  func.func @transform_1(%arg0: i32) -> (i32, i32) {
    %c0_i32 = arith.constant 0 : i32
    %c0_i32_0 = arith.constant 0 : i32
    %c0_i32_1 = arith.constant 0 : i32
    return %c0_i32, %c0_i32_0 : i32, i32
  }
  func.func @transform_2(%arg0: i32) -> (i32, i32) {
    %c0_i32 = arith.constant 0 : i32
    %c0_i32_0 = arith.constant 0 : i32
    %c0_i32_1 = arith.constant 0 : i32
    return %c0_i32, %c0_i32_0 : i32, i32
  }
  func.func @transform_3(%arg0: i32) -> (i32, i32) {
    %c0_i32 = arith.constant 0 : i32
    %c0_i32_0 = arith.constant 0 : i32
    %c0_i32_1 = arith.constant 0 : i32
    return %c0_i32, %c0_i32_0 : i32, i32
  }
  func.func @transform_4(%arg0: i32) -> (i32, i32) {
    %c0_i32 = arith.constant 0 : i32
    %c0_i32_0 = arith.constant 0 : i32
    %c0_i32_1 = arith.constant 0 : i32
    return %c0_i32, %c0_i32_0 : i32, i32
  }
  func.func @transform_5(%arg0: i32) -> (i32, i32) {
    %c0_i32 = arith.constant 0 : i32
    %c0_i32_0 = arith.constant 0 : i32
    return %arg0, %c0_i32 : i32, i32
  }
  func.func @transform_6(%arg0: i32) -> (i32, i32) {
    %c0_i32 = arith.constant 0 : i32
    %c0_i32_0 = arith.constant 0 : i32
    return %arg0, %c0_i32 : i32, i32
  }
}

</mosaic_0001>

<llo_original>
// kernel: tpu_custom_call.1
$region0: #{tpu_custom_call.1}
  #allocation0 [shape = 'u32[]', space=smem, size = 0x4, offset = 0x4, fixed_abs, tag = 'smem constant byte address 0x4 - core index']
  #allocation1 [shape = 'u32[144,128]{1,0:T(1,128)}', space=vmem, size = 0x12000, scoped, tag = 'internal scratch']
  %s0 = inlined_call_operand.vmem [shape: f32[512,4], index: 0, kind: input, shape index: {}]
  %s1 = inlined_call_operand.vmem [shape: f32[4,8], index: 1, kind: input, shape index: {}]
  %s2 = inlined_call_operand.vmem [shape: f32[4,4], index: 2, kind: input, shape index: {}]
  %s3 = inlined_call_operand.vmem [shape: f32[1,4], index: 3, kind: input, shape index: {}]
  %s4 = inlined_call_operand.vmem [shape: f32[1,4], index: 4, kind: input, shape index: {}]
  %s5 = inlined_call_operand.vmem [shape: f32[512,8], index: 5, kind: output, shape index: {0}]
  %s6 = inlined_call_operand.vmem [shape: f32[512,4], index: 6, kind: output, shape index: {1}]
  %7 = xla_tuple %s5, %s6
  %s8 = sld [smem:[#allocation0]]
  $region38: #{tpu_custom_call.1} parent=0
    _
  %s10 = ssub.s32 1, %s8
  %s11 = scalar_select 0, %s10, %s8
  // Predicated region
  $region2: #{tpu_custom_call.1} parent=0 // pred_check
    _
  $region3: #{tpu_custom_call.1} parent=0 // pred_check_branch
    %13 = sbr.rel (0) target = $region5
  $region4: #{tpu_custom_call.1} parent=0 // pred_region
    _
  $region5: #{tpu_custom_call.1} parent=0 // pred_fallthru
    _
  // Predicated region
  $region6: #{tpu_custom_call.1} parent=0 // pred_check
    _
  $region7: #{tpu_custom_call.1} parent=0 // pred_check_branch
    %15 = sbr.rel (0) target = $region9
  $region8: #{tpu_custom_call.1} parent=0 // pred_region
    _
  $region9: #{tpu_custom_call.1} parent=0 // pred_fallthru
    _
  // Predicated region
  $region10: #{tpu_custom_call.1} parent=0 // pred_check
    _
  $region11: #{tpu_custom_call.1} parent=0 // pred_check_branch
    %17 = sbr.rel (0) target = $region13
  $region12: #{tpu_custom_call.1} parent=0 // pred_region
    _
  $region13: #{tpu_custom_call.1} parent=0 // pred_fallthru
    _
  // Predicated region
  $region14: #{tpu_custom_call.1} parent=0 // pred_check
    _
  $region15: #{tpu_custom_call.1} parent=0 // pred_check_branch
    %19 = sbr.rel (0) target = $region17
  $region16: #{tpu_custom_call.1} parent=0 // pred_region
    _
  $region17: #{tpu_custom_call.1} parent=0 // pred_fallthru
    _
  // Predicated region
  $region18: #{tpu_custom_call.1} parent=0 // pred_check
    _
  $region19: #{tpu_custom_call.1} parent=0 // pred_check_branch
    %21 = sbr.rel (0) target = $region21
  $region20: #{tpu_custom_call.1} parent=0 // pred_region
    _
  $region21: #{tpu_custom_call.1} parent=0 // pred_fallthru
    _
  %v22 = vld [vmem:[%s0] sm:$0xff]
  %v23 = vld [vmem:[%s0 + $0x8] sm:$0xff]
  %v24 = vld [vmem:[%s0 + $0x10] sm:$0xff]
  %v25 = vld [vmem:[%s0 + $0x18] sm:$0xff]
  %v26 = vld [vmem:[%s0 + $0x20] sm:$0xff]
  %v27 = vld [vmem:[%s0 + $0x28] sm:$0xff]
  %v28 = vld [vmem:[%s0 + $0x30] sm:$0xff]
  %v29 = vld [vmem:[%s0 + $0x38] sm:$0xff]
  %v30 = vld [vmem:[%s0 + $0x40] sm:$0xff]
  %v31 = vld [vmem:[%s0 + $0x48] sm:$0xff]
  %v32 = vld [vmem:[%s0 + $0x50] sm:$0xff]
  %v33 = vld [vmem:[%s0 + $0x58] sm:$0xff]
  %v34 = vld [vmem:[%s0 + $0x60] sm:$0xff]
  %v35 = vld [vmem:[%s0 + $0x68] sm:$0xff]
  %v36 = vld [vmem:[%s0 + $0x70] sm:$0xff]
  %v37 = vld [vmem:[%s0 + $0x78] sm:$0xff]
  %v38 = vld [vmem:[%s0 + $0x80] sm:$0xff]
  %v39 = vld [vmem:[%s0 + $0x88] sm:$0xff]
  %v40 = vld [vmem:[%s0 + $0x90] sm:$0xff]
  %v41 = vld [vmem:[%s0 + $0x98] sm:$0xff]
  %v42 = vld [vmem:[%s0 + $0xa0] sm:$0xff]
  %v43 = vld [vmem:[%s0 + $0xa8] sm:$0xff]
  %v44 = vld [vmem:[%s0 + $0xb0] sm:$0xff]
  %v45 = vld [vmem:[%s0 + $0xb8] sm:$0xff]
  %v46 = vld [vmem:[%s0 + $0xc0] sm:$0xff]
  %v47 = vld [vmem:[%s0 + $0xc8] sm:$0xff]
  %v48 = vld [vmem:[%s0 + $0xd0] sm:$0xff]
  %v49 = vld [vmem:[%s0 + $0xd8] sm:$0xff]
  %v50 = vld [vmem:[%s0 + $0xe0] sm:$0xff]
  %v51 = vld [vmem:[%s0 + $0xe8] sm:$0xff]
  %v52 = vld [vmem:[%s0 + $0xf0] sm:$0xff]
  %v53 = vld [vmem:[%s0 + $0xf8] sm:$0xff]
  %v54 = vld [vmem:[%s0 + $0x100] sm:$0xff]
  %v55 = vld [vmem:[%s0 + $0x108] sm:$0xff]
  %v56 = vld [vmem:[%s0 + $0x110] sm:$0xff]
  %v57 = vld [vmem:[%s0 + $0x118] sm:$0xff]
  %v58 = vld [vmem:[%s0 + $0x120] sm:$0xff]
  %v59 = vld [vmem:[%s0 + $0x128] sm:$0xff]
  %v60 = vld [vmem:[%s0 + $0x130] sm:$0xff]
  %v61 = vld [vmem:[%s0 + $0x138] sm:$0xff]
  %v62 = vld [vmem:[%s0 + $0x140] sm:$0xff]
  %v63 = vld [vmem:[%s0 + $0x148] sm:$0xff]
  %v64 = vld [vmem:[%s0 + $0x150] sm:$0xff]
  %v65 = vld [vmem:[%s0 + $0x158] sm:$0xff]
  %v66 = vld [vmem:[%s0 + $0x160] sm:$0xff]
  %v67 = vld [vmem:[%s0 + $0x168] sm:$0xff]
  %v68 = vld [vmem:[%s0 + $0x170] sm:$0xff]
  %v69 = vld [vmem:[%s0 + $0x178] sm:$0xff]
  %v70 = vld [vmem:[%s0 + $0x180] sm:$0xff]
  %v71 = vld [vmem:[%s0 + $0x188] sm:$0xff]
  %v72 = vld [vmem:[%s0 + $0x190] sm:$0xff]
  %v73 = vld [vmem:[%s0 + $0x198] sm:$0xff]
  %v74 = vld [vmem:[%s0 + $0x1a0] sm:$0xff]
  %v75 = vld [vmem:[%s0 + $0x1a8] sm:$0xff]
  %v76 = vld [vmem:[%s0 + $0x1b0] sm:$0xff]
  %v77 = vld [vmem:[%s0 + $0x1b8] sm:$0xff]
  %v78 = vld [vmem:[%s0 + $0x1c0] sm:$0xff]
  %v79 = vld [vmem:[%s0 + $0x1c8] sm:$0xff]
  %v80 = vld [vmem:[%s0 + $0x1d0] sm:$0xff]
  %v81 = vld [vmem:[%s0 + $0x1d8] sm:$0xff]
  %v82 = vld [vmem:[%s0 + $0x1e0] sm:$0xff]
  %v83 = vld [vmem:[%s0 + $0x1e8] sm:$0xff]
  %v84 = vld [vmem:[%s0 + $0x1f0] sm:$0xff]
  %v85 = vld [vmem:[%s0 + $0x1f8] sm:$0xff]
  %v86 = vld [vmem:[%s1] sm:$0xf]
  %vm87 = vcmask 31744
  %v89 = vsel %vm87, %v22, 0
  %v92 = vsel %vm87, %v23, 0
  %v95 = vsel %vm87, %v24, 0
  %v98 = vsel %vm87, %v25, 0
  %v101 = vsel %vm87, %v26, 0
  %v104 = vsel %vm87, %v27, 0
  %v107 = vsel %vm87, %v28, 0
  %v110 = vsel %vm87, %v29, 0
  %v113 = vsel %vm87, %v30, 0
  %v116 = vsel %vm87, %v31, 0
  %v119 = vsel %vm87, %v32, 0
  %v122 = vsel %vm87, %v33, 0
  %v125 = vsel %vm87, %v34, 0
  %v128 = vsel %vm87, %v35, 0
  %v131 = vsel %vm87, %v36, 0
  %v134 = vsel %vm87, %v37, 0
  %v137 = vsel %vm87, %v38, 0
  %v140 = vsel %vm87, %v39, 0
  %v143 = vsel %vm87, %v40, 0
  %v146 = vsel %vm87, %v41, 0
  %v149 = vsel %vm87, %v42, 0
  %v152 = vsel %vm87, %v43, 0
  %v155 = vsel %vm87, %v44, 0
  %v158 = vsel %vm87, %v45, 0
  %v161 = vsel %vm87, %v46, 0
  %v164 = vsel %vm87, %v47, 0
  %v167 = vsel %vm87, %v48, 0
  %v170 = vsel %vm87, %v49, 0
  %v173 = vsel %vm87, %v50, 0
  %v176 = vsel %vm87, %v51, 0
  %v179 = vsel %vm87, %v52, 0
  %v182 = vsel %vm87, %v53, 0
  %v185 = vsel %vm87, %v54, 0
  %v188 = vsel %vm87, %v55, 0
  %v191 = vsel %vm87, %v56, 0
  %v194 = vsel %vm87, %v57, 0
  %v197 = vsel %vm87, %v58, 0
  %v200 = vsel %vm87, %v59, 0
  %v203 = vsel %vm87, %v60, 0
  %v206 = vsel %vm87, %v61, 0
  %v209 = vsel %vm87, %v62, 0
  %v212 = vsel %vm87, %v63, 0
  %v215 = vsel %vm87, %v64, 0
  %v218 = vsel %vm87, %v65, 0
  %v221 = vsel %vm87, %v66, 0
  %v224 = vsel %vm87, %v67, 0
  %v227 = vsel %vm87, %v68, 0
  %v230 = vsel %vm87, %v69, 0
  %v233 = vsel %vm87, %v70, 0
  %v236 = vsel %vm87, %v71, 0
  %v239 = vsel %vm87, %v72, 0
  %v242 = vsel %vm87, %v73, 0
  %v245 = vsel %vm87, %v74, 0
  %v248 = vsel %vm87, %v75, 0
  %v251 = vsel %vm87, %v76, 0
  %v254 = vsel %vm87, %v77, 0
  %v257 = vsel %vm87, %v78, 0
  %v260 = vsel %vm87, %v79, 0
  %v263 = vsel %vm87, %v80, 0
  %v266 = vsel %vm87, %v81, 0
  %v269 = vsel %vm87, %v82, 0
  %v272 = vsel %vm87, %v83, 0
  %v275 = vsel %vm87, %v84, 0
  %v278 = vsel %vm87, %v85, 0
  %vm280 = vcmask 1043456
  %v282 = vsel %vm280, %v86, 0
  %284 = vmatprep.subr.mxu0 0.0
  %285 = vmatpush1.msra.mxu0 0.0
  %286 = vmatprep.subr.mxu0 0.0
  %287 = vmatpush1.msra.mxu0 0.0
  %288 = vmatprep.subr.mxu0 0.0
  %289 = vmatpush1.msra.mxu0 0.0
  %290 = vmatprep.subr.mxu0 0.0
  %291 = vmatpush1.msra.mxu0 0.0
  %292 = vmatprep.subr.mxu0 0.0
  %293 = vmatpush1.msra.mxu0 0.0
  %294 = vmatprep.subr.mxu0 0.0
  %295 = vmatpush1.msra.mxu0 0.0
  %296 = vmatprep.subr.mxu0 0.0
  %297 = vmatpush1.msra.mxu0 0.0
  %298 = vmatprep.subr.mxu0 0.0
  %299 = vmatpush1.msra.mxu0 0.0
  %300 = vmatprep.subr.mxu0 0.0
  %301 = vmatpush1.msra.mxu0 0.0
  %302 = vmatprep.subr.mxu0 0.0
  %303 = vmatpush1.msra.mxu0 0.0
  %304 = vmatprep.subr.mxu0 0.0
  %305 = vmatpush1.msra.mxu0 0.0
  %306 = vmatprep.subr.mxu0 0.0
  %307 = vmatpush1.msra.mxu0 0.0
  %308 = vmatprep.subr.mxu0 0.0
  %309 = vmatpush1.msra.mxu0 0.0
  %310 = vmatprep.subr.mxu0 0.0
  %311 = vmatpush1.msra.mxu0 0.0
  %312 = vmatprep.subr.mxu0 0.0
  %313 = vmatpush1.msra.mxu0 0.0
  %314 = vmatprep.subr.mxu0 0.0
  %315 = vmatpush1.msra.mxu0 %v282
  %316 = vmatprep.subr.mxu0 0.0
  %317 = vmatpush2.msra.mxu0 0.0
  %318 = vmatprep.subr.mxu0 0.0
  %319 = vmatpush2.msra.mxu0 0.0
  %320 = vmatprep.subr.mxu0 0.0
  %321 = vmatpush2.msra.mxu0 0.0
  %322 = vmatprep.subr.mxu0 0.0
  %323 = vmatpush2.msra.mxu0 0.0
  %324 = vmatprep.subr.mxu0 0.0
  %325 = vmatpush2.msra.mxu0 0.0
  %326 = vmatprep.subr.mxu0 0.0
  %327 = vmatpush2.msra.mxu0 0.0
  %328 = vmatprep.subr.mxu0 0.0
  %329 = vmatpush2.msra.mxu0 0.0
  %330 = vmatprep.subr.mxu0 0.0
  %331 = vmatpush2.msra.mxu0 0.0
  %332 = vmatprep.subr.mxu0 0.0
  %333 = vmatpush2.msra.mxu0 0.0
  %334 = vmatprep.subr.mxu0 0.0
  %335 = vmatpush2.msra.mxu0 0.0
  %336 = vmatprep.subr.mxu0 0.0
  %337 = vmatpush2.msra.mxu0 0.0
  %338 = vmatprep.subr.mxu0 0.0
  %339 = vmatpush2.msra.mxu0 0.0
  %340 = vmatprep.subr.mxu0 0.0
  %341 = vmatpush2.msra.mxu0 0.0
  %342 = vmatprep.subr.mxu0 0.0
  %343 = vmatpush2.msra.mxu0 0.0
  %344 = vmatprep.subr.mxu0 0.0
  %345 = vmatpush2.msra.mxu0 0.0
  %346 = vmatprep.subr.mxu0 0.0
  %347 = vmatpush2.msra.mxu0 0.0
  %348 = vmatprep.mubr.f32.mxu0 0.0
  %349 = vmatmul.mubr.f32.gmra.mxu0 %v89
  %v350 = vpop.f32.mrf.mxu0
  %v351 = vadd.f32 0.0, %v350
  %v352 = vpop.f32.mrf.mxu0
  %353 = vmatprep.mubr.f32.mxu0 0.0
  %354 = vmatmul.mubr.f32.gmra.mxu0 %v92
  %v355 = vpop.f32.mrf.mxu0
  %v356 = vadd.f32 0.0, %v355
  %v357 = vpop.f32.mrf.mxu0
  %358 = vmatprep.mubr.f32.mxu0 0.0
  %359 = vmatmul.mubr.f32.gmra.mxu0 %v95
  %v360 = vpop.f32.mrf.mxu0
  %v361 = vadd.f32 0.0, %v360
  %v362 = vpop.f32.mrf.mxu0
  %363 = vmatprep.mubr.f32.mxu0 0.0
  %364 = vmatmul.mubr.f32.gmra.mxu0 %v98
  %v365 = vpop.f32.mrf.mxu0
  %v366 = vadd.f32 0.0, %v365
  %v367 = vpop.f32.mrf.mxu0
  %368 = vmatprep.mubr.f32.mxu0 0.0
  %369 = vmatmul.mubr.f32.gmra.mxu0 %v101
  %v370 = vpop.f32.mrf.mxu0
  %v371 = vadd.f32 0.0, %v370
  %v372 = vpop.f32.mrf.mxu0
  %373 = vmatprep.mubr.f32.mxu0 0.0
  %374 = vmatmul.mubr.f32.gmra.mxu0 %v104
  %v375 = vpop.f32.mrf.mxu0
  %v376 = vadd.f32 0.0, %v375
  %v377 = vpop.f32.mrf.mxu0
  %378 = vmatprep.mubr.f32.mxu0 0.0
  %379 = vmatmul.mubr.f32.gmra.mxu0 %v107
  %v380 = vpop.f32.mrf.mxu0
  %v381 = vadd.f32 0.0, %v380
  %v382 = vpop.f32.mrf.mxu0
  %383 = vmatprep.mubr.f32.mxu0 0.0
  %384 = vmatmul.mubr.f32.gmra.mxu0 %v110
  %v385 = vpop.f32.mrf.mxu0
  %v386 = vadd.f32 0.0, %v385
  %v387 = vpop.f32.mrf.mxu0
  %388 = vmatprep.mubr.f32.mxu0 0.0
  %389 = vmatmul.mubr.f32.gmra.mxu0 %v113
  %v390 = vpop.f32.mrf.mxu0
  %v391 = vadd.f32 0.0, %v390
  %v392 = vpop.f32.mrf.mxu0
  %393 = vmatprep.mubr.f32.mxu0 0.0
  %394 = vmatmul.mubr.f32.gmra.mxu0 %v116
  %v395 = vpop.f32.mrf.mxu0
  %v396 = vadd.f32 0.0, %v395
  %v397 = vpop.f32.mrf.mxu0
  %398 = vmatprep.mubr.f32.mxu0 0.0
  %399 = vmatmul.mubr.f32.gmra.mxu0 %v119
  %v400 = vpop.f32.mrf.mxu0
  %v401 = vadd.f32 0.0, %v400
  %v402 = vpop.f32.mrf.mxu0
  %403 = vmatprep.mubr.f32.mxu0 0.0
  %404 = vmatmul.mubr.f32.gmra.mxu0 %v122
  %v405 = vpop.f32.mrf.mxu0
  %v406 = vadd.f32 0.0, %v405
  %v407 = vpop.f32.mrf.mxu0
  %408 = vmatprep.mubr.f32.mxu0 0.0
  %409 = vmatmul.mubr.f32.gmra.mxu0 %v125
  %v410 = vpop.f32.mrf.mxu0
  %v411 = vadd.f32 0.0, %v410
  %v412 = vpop.f32.mrf.mxu0
  %413 = vmatprep.mubr.f32.mxu0 0.0
  %414 = vmatmul.mubr.f32.gmra.mxu0 %v128
  %v415 = vpop.f32.mrf.mxu0
  %v416 = vadd.f32 0.0, %v415
  %v417 = vpop.f32.mrf.mxu0
  %418 = vmatprep.mubr.f32.mxu0 0.0
  %419 = vmatmul.mubr.f32.gmra.mxu0 %v131
  %v420 = vpop.f32.mrf.mxu0
  %v421 = vadd.f32 0.0, %v420
  %v422 = vpop.f32.mrf.mxu0
  %423 = vmatprep.mubr.f32.mxu0 0.0
  %424 = vmatmul.mubr.f32.gmra.mxu0 %v134
  %v425 = vpop.f32.mrf.mxu0
  %v426 = vadd.f32 0.0, %v425
  %v427 = vpop.f32.mrf.mxu0
  %428 = vmatprep.mubr.f32.mxu0 0.0
  %429 = vmatmul.mubr.f32.gmra.mxu0 %v137
  %v430 = vpop.f32.mrf.mxu0
  %v431 = vadd.f32 0.0, %v430
  %v432 = vpop.f32.mrf.mxu0
  %433 = vmatprep.mubr.f32.mxu0 0.0
  %434 = vmatmul.mubr.f32.gmra.mxu0 %v140
  %v435 = vpop.f32.mrf.mxu0
  %v436 = vadd.f32 0.0, %v435
  %v437 = vpop.f32.mrf.mxu0
  %438 = vmatprep.mubr.f32.mxu0 0.0
  %439 = vmatmul.mubr.f32.gmra.mxu0 %v143
  %v440 = vpop.f32.mrf.mxu0
  %v441 = vadd.f32 0.0, %v440
  %v442 = vpop.f32.mrf.mxu0
  %443 = vmatprep.mubr.f32.mxu0 0.0
  %444 = vmatmul.mubr.f32.gmra.mxu0 %v146
  %v445 = vpop.f32.mrf.mxu0
  %v446 = vadd.f32 0.0, %v445
  %v447 = vpop.f32.mrf.mxu0
  %448 = vmatprep.mubr.f32.mxu0 0.0
  %449 = vmatmul.mubr.f32.gmra.mxu0 %v149
  %v450 = vpop.f32.mrf.mxu0
  %v451 = vadd.f32 0.0, %v450
  %v452 = vpop.f32.mrf.mxu0
  %453 = vmatprep.mubr.f32.mxu0 0.0
  %454 = vmatmul.mubr.f32.gmra.mxu0 %v152
  %v455 = vpop.f32.mrf.mxu0
  %v456 = vadd.f32 0.0, %v455
  %v457 = vpop.f32.mrf.mxu0
  %458 = vmatprep.mubr.f32.mxu0 0.0
  %459 = vmatmul.mubr.f32.gmra.mxu0 %v155
  %v460 = vpop.f32.mrf.mxu0
  %v461 = vadd.f32 0.0, %v460
  %v462 = vpop.f32.mrf.mxu0
  %463 = vmatprep.mubr.f32.mxu0 0.0
  %464 = vmatmul.mubr.f32.gmra.mxu0 %v158
  %v465 = vpop.f32.mrf.mxu0
  %v466 = vadd.f32 0.0, %v465
  %v467 = vpop.f32.mrf.mxu0
  %468 = vmatprep.mubr.f32.mxu0 0.0
  %469 = vmatmul.mubr.f32.gmra.mxu0 %v161
  %v470 = vpop.f32.mrf.mxu0
  %v471 = vadd.f32 0.0, %v470
  %v472 = vpop.f32.mrf.mxu0
  %473 = vmatprep.mubr.f32.mxu0 0.0
  %474 = vmatmul.mubr.f32.gmra.mxu0 %v164
  %v475 = vpop.f32.mrf.mxu0
  %v476 = vadd.f32 0.0, %v475
  %v477 = vpop.f32.mrf.mxu0
  %478 = vmatprep.mubr.f32.mxu0 0.0
  %479 = vmatmul.mubr.f32.gmra.mxu0 %v167
  %v480 = vpop.f32.mrf.mxu0
  %v481 = vadd.f32 0.0, %v480
  %v482 = vpop.f32.mrf.mxu0
  %483 = vmatprep.mubr.f32.mxu0 0.0
  %484 = vmatmul.mubr.f32.gmra.mxu0 %v170
  %v485 = vpop.f32.mrf.mxu0
  %v486 = vadd.f32 0.0, %v485
  %v487 = vpop.f32.mrf.mxu0
  %488 = vmatprep.mubr.f32.mxu0 0.0
  %489 = vmatmul.mubr.f32.gmra.mxu0 %v173
  %v490 = vpop.f32.mrf.mxu0
  %v491 = vadd.f32 0.0, %v490
  %v492 = vpop.f32.mrf.mxu0
  %493 = vmatprep.mubr.f32.mxu0 0.0
  %494 = vmatmul.mubr.f32.gmra.mxu0 %v176
  %v495 = vpop.f32.mrf.mxu0
  %v496 = vadd.f32 0.0, %v495
  %v497 = vpop.f32.mrf.mxu0
  %498 = vmatprep.mubr.f32.mxu0 0.0
  %499 = vmatmul.mubr.f32.gmra.mxu0 %v179
  %v500 = vpop.f32.mrf.mxu0
  %v501 = vadd.f32 0.0, %v500
  %v502 = vpop.f32.mrf.mxu0
  %503 = vmatprep.mubr.f32.mxu0 0.0
  %504 = vmatmul.mubr.f32.gmra.mxu0 %v182
  %v505 = vpop.f32.mrf.mxu0
  %v506 = vadd.f32 0.0, %v505
  %v507 = vpop.f32.mrf.mxu0
  %508 = vmatprep.mubr.f32.mxu0 0.0
  %509 = vmatmul.mubr.f32.gmra.mxu0 %v185
  %v510 = vpop.f32.mrf.mxu0
  %v511 = vadd.f32 0.0, %v510
  %v512 = vpop.f32.mrf.mxu0
  %513 = vmatprep.mubr.f32.mxu0 0.0
  %514 = vmatmul.mubr.f32.gmra.mxu0 %v188
  %v515 = vpop.f32.mrf.mxu0
  %v516 = vadd.f32 0.0, %v515
  %v517 = vpop.f32.mrf.mxu0
  %518 = vmatprep.mubr.f32.mxu0 0.0
  %519 = vmatmul.mubr.f32.gmra.mxu0 %v191
  %v520 = vpop.f32.mrf.mxu0
  %v521 = vadd.f32 0.0, %v520
  %v522 = vpop.f32.mrf.mxu0
  %523 = vmatprep.mubr.f32.mxu0 0.0
  %524 = vmatmul.mubr.f32.gmra.mxu0 %v194
  %v525 = vpop.f32.mrf.mxu0
  %v526 = vadd.f32 0.0, %v525
  %v527 = vpop.f32.mrf.mxu0
  %528 = vmatprep.mubr.f32.mxu0 0.0
  %529 = vmatmul.mubr.f32.gmra.mxu0 %v197
  %v530 = vpop.f32.mrf.mxu0
  %v531 = vadd.f32 0.0, %v530
  %v532 = vpop.f32.mrf.mxu0
  %533 = vmatprep.mubr.f32.mxu0 0.0
  %534 = vmatmul.mubr.f32.gmra.mxu0 %v200
  %v535 = vpop.f32.mrf.mxu0
  %v536 = vadd.f32 0.0, %v535
  %v537 = vpop.f32.mrf.mxu0
  %538 = vmatprep.mubr.f32.mxu0 0.0
  %539 = vmatmul.mubr.f32.gmra.mxu0 %v203
  %v540 = vpop.f32.mrf.mxu0
  %v541 = vadd.f32 0.0, %v540
  %v542 = vpop.f32.mrf.mxu0
  %543 = vmatprep.mubr.f32.mxu0 0.0
  %544 = vmatmul.mubr.f32.gmra.mxu0 %v206
  %v545 = vpop.f32.mrf.mxu0
  %v546 = vadd.f32 0.0, %v545
  %v547 = vpop.f32.mrf.mxu0
  %548 = vmatprep.mubr.f32.mxu0 0.0
  %549 = vmatmul.mubr.f32.gmra.mxu0 %v209
  %v550 = vpop.f32.mrf.mxu0
  %v551 = vadd.f32 0.0, %v550
  %v552 = vpop.f32.mrf.mxu0
  %553 = vmatprep.mubr.f32.mxu0 0.0
  %554 = vmatmul.mubr.f32.gmra.mxu0 %v212
  %v555 = vpop.f32.mrf.mxu0
  %v556 = vadd.f32 0.0, %v555
  %v557 = vpop.f32.mrf.mxu0
  %558 = vmatprep.mubr.f32.mxu0 0.0
  %559 = vmatmul.mubr.f32.gmra.mxu0 %v215
  %v560 = vpop.f32.mrf.mxu0
  %v561 = vadd.f32 0.0, %v560
  %v562 = vpop.f32.mrf.mxu0
  %563 = vmatprep.mubr.f32.mxu0 0.0
  %564 = vmatmul.mubr.f32.gmra.mxu0 %v218
  %v565 = vpop.f32.mrf.mxu0
  %v566 = vadd.f32 0.0, %v565
  %v567 = vpop.f32.mrf.mxu0
  %568 = vmatprep.mubr.f32.mxu0 0.0
  %569 = vmatmul.mubr.f32.gmra.mxu0 %v221
  %v570 = vpop.f32.mrf.mxu0
  %v571 = vadd.f32 0.0, %v570
  %v572 = vpop.f32.mrf.mxu0
  %573 = vmatprep.mubr.f32.mxu0 0.0
  %574 = vmatmul.mubr.f32.gmra.mxu0 %v224
  %v575 = vpop.f32.mrf.mxu0
  %v576 = vadd.f32 0.0, %v575
  %v577 = vpop.f32.mrf.mxu0
  %578 = vmatprep.mubr.f32.mxu0 0.0
  %579 = vmatmul.mubr.f32.gmra.mxu0 %v227
  %v580 = vpop.f32.mrf.mxu0
  %v581 = vadd.f32 0.0, %v580
  %v582 = vpop.f32.mrf.mxu0
  %583 = vmatprep.mubr.f32.mxu0 0.0
  %584 = vmatmul.mubr.f32.gmra.mxu0 %v230
  %v585 = vpop.f32.mrf.mxu0
  %v586 = vadd.f32 0.0, %v585
  %v587 = vpop.f32.mrf.mxu0
  %588 = vmatprep.mubr.f32.mxu0 0.0
  %589 = vmatmul.mubr.f32.gmra.mxu0 %v233
  %v590 = vpop.f32.mrf.mxu0
  %v591 = vadd.f32 0.0, %v590
  %v592 = vpop.f32.mrf.mxu0
  %593 = vmatprep.mubr.f32.mxu0 0.0
  %594 = vmatmul.mubr.f32.gmra.mxu0 %v236
  %v595 = vpop.f32.mrf.mxu0
  %v596 = vadd.f32 0.0, %v595
  %v597 = vpop.f32.mrf.mxu0
  %598 = vmatprep.mubr.f32.mxu0 0.0
  %599 = vmatmul.mubr.f32.gmra.mxu0 %v239
  %v600 = vpop.f32.mrf.mxu0
  %v601 = vadd.f32 0.0, %v600
  %v602 = vpop.f32.mrf.mxu0
  %603 = vmatprep.mubr.f32.mxu0 0.0
  %604 = vmatmul.mubr.f32.gmra.mxu0 %v242
  %v605 = vpop.f32.mrf.mxu0
  %v606 = vadd.f32 0.0, %v605
  %v607 = vpop.f32.mrf.mxu0
  %608 = vmatprep.mubr.f32.mxu0 0.0
  %609 = vmatmul.mubr.f32.gmra.mxu0 %v245
  %v610 = vpop.f32.mrf.mxu0
  %v611 = vadd.f32 0.0, %v610
  %v612 = vpop.f32.mrf.mxu0
  %613 = vmatprep.mubr.f32.mxu0 0.0
  %614 = vmatmul.mubr.f32.gmra.mxu0 %v248
  %v615 = vpop.f32.mrf.mxu0
  %v616 = vadd.f32 0.0, %v615
  %v617 = vpop.f32.mrf.mxu0
  %618 = vmatprep.mubr.f32.mxu0 0.0
  %619 = vmatmul.mubr.f32.gmra.mxu0 %v251
  %v620 = vpop.f32.mrf.mxu0
  %v621 = vadd.f32 0.0, %v620
  %v622 = vpop.f32.mrf.mxu0
  %623 = vmatprep.mubr.f32.mxu0 0.0
  %624 = vmatmul.mubr.f32.gmra.mxu0 %v254
  %v625 = vpop.f32.mrf.mxu0
  %v626 = vadd.f32 0.0, %v625
  %v627 = vpop.f32.mrf.mxu0
  %628 = vmatprep.mubr.f32.mxu0 0.0
  %629 = vmatmul.mubr.f32.gmra.mxu0 %v257
  %v630 = vpop.f32.mrf.mxu0
  %v631 = vadd.f32 0.0, %v630
  %v632 = vpop.f32.mrf.mxu0
  %633 = vmatprep.mubr.f32.mxu0 0.0
  %634 = vmatmul.mubr.f32.gmra.mxu0 %v260
  %v635 = vpop.f32.mrf.mxu0
  %v636 = vadd.f32 0.0, %v635
  %v637 = vpop.f32.mrf.mxu0
  %638 = vmatprep.mubr.f32.mxu0 0.0
  %639 = vmatmul.mubr.f32.gmra.mxu0 %v263
  %v640 = vpop.f32.mrf.mxu0
  %v641 = vadd.f32 0.0, %v640
  %v642 = vpop.f32.mrf.mxu0
  %643 = vmatprep.mubr.f32.mxu0 0.0
  %644 = vmatmul.mubr.f32.gmra.mxu0 %v266
  %v645 = vpop.f32.mrf.mxu0
  %v646 = vadd.f32 0.0, %v645
  %v647 = vpop.f32.mrf.mxu0
  %648 = vmatprep.mubr.f32.mxu0 0.0
  %649 = vmatmul.mubr.f32.gmra.mxu0 %v269
  %v650 = vpop.f32.mrf.mxu0
  %v651 = vadd.f32 0.0, %v650
  %v652 = vpop.f32.mrf.mxu0
  %653 = vmatprep.mubr.f32.mxu0 0.0
  %654 = vmatmul.mubr.f32.gmra.mxu0 %v272
  %v655 = vpop.f32.mrf.mxu0
  %v656 = vadd.f32 0.0, %v655
  %v657 = vpop.f32.mrf.mxu0
  %658 = vmatprep.mubr.f32.mxu0 0.0
  %659 = vmatmul.mubr.f32.gmra.mxu0 %v275
  %v660 = vpop.f32.mrf.mxu0
  %v661 = vadd.f32 0.0, %v660
  %v662 = vpop.f32.mrf.mxu0
  %663 = vmatprep.mubr.f32.mxu0 0.0
  %664 = vmatmul.mubr.f32.gmra.mxu0 %v278
  %v665 = vpop.f32.mrf.mxu0
  %v666 = vadd.f32 0.0, %v665
  %v667 = vpop.f32.mrf.mxu0
  %668 = vdwg.mxu0
  %vm669 = vcmask 64512
  %670 = vst.msk [vmem:[%s5] sm:$0xff] %vm669, %v351
  %671 = vst.msk [vmem:[%s5 + $0x8] sm:$0xff] %vm669, %v356
  %672 = vst.msk [vmem:[%s5 + $0x10] sm:$0xff] %vm669, %v361
  %673 = vst.msk [vmem:[%s5 + $0x18] sm:$0xff] %vm669, %v366
  %674 = vst.msk [vmem:[%s5 + $0x20] sm:$0xff] %vm669, %v371
  %675 = vst.msk [vmem:[%s5 + $0x28] sm:$0xff] %vm669, %v376
  %676 = vst.msk [vmem:[%s5 + $0x30] sm:$0xff] %vm669, %v381
  %677 = vst.msk [vmem:[%s5 + $0x38] sm:$0xff] %vm669, %v386
  %678 = vst.msk [vmem:[%s5 + $0x40] sm:$0xff] %vm669, %v391
  %679 = vst.msk [vmem:[%s5 + $0x48] sm:$0xff] %vm669, %v396
  %680 = vst.msk [vmem:[%s5 + $0x50] sm:$0xff] %vm669, %v401
  %681 = vst.msk [vmem:[%s5 + $0x58] sm:$0xff] %vm669, %v406
  %682 = vst.msk [vmem:[%s5 + $0x60] sm:$0xff] %vm669, %v411
  %683 = vst.msk [vmem:[%s5 + $0x68] sm:$0xff] %vm669, %v416
  %684 = vst.msk [vmem:[%s5 + $0x70] sm:$0xff] %vm669, %v421
  %685 = vst.msk [vmem:[%s5 + $0x78] sm:$0xff] %vm669, %v426
  %686 = vst.msk [vmem:[%s5 + $0x80] sm:$0xff] %vm669, %v431
  %687 = vst.msk [vmem:[%s5 + $0x88] sm:$0xff] %vm669, %v436
  %688 = vst.msk [vmem:[%s5 + $0x90] sm:$0xff] %vm669, %v441
  %689 = vst.msk [vmem:[%s5 + $0x98] sm:$0xff] %vm669, %v446
  %690 = vst.msk [vmem:[%s5 + $0xa0] sm:$0xff] %vm669, %v451
  %691 = vst.msk [vmem:[%s5 + $0xa8] sm:$0xff] %vm669, %v456
  %692 = vst.msk [vmem:[%s5 + $0xb0] sm:$0xff] %vm669, %v461
  %693 = vst.msk [vmem:[%s5 + $0xb8] sm:$0xff] %vm669, %v466
  %694 = vst.msk [vmem:[%s5 + $0xc0] sm:$0xff] %vm669, %v471
  %695 = vst.msk [vmem:[%s5 + $0xc8] sm:$0xff] %vm669, %v476
  %696 = vst.msk [vmem:[%s5 + $0xd0] sm:$0xff] %vm669, %v481
  %697 = vst.msk [vmem:[%s5 + $0xd8] sm:$0xff] %vm669, %v486
  %698 = vst.msk [vmem:[%s5 + $0xe0] sm:$0xff] %vm669, %v491
  %699 = vst.msk [vmem:[%s5 + $0xe8] sm:$0xff] %vm669, %v496
  %700 = vst.msk [vmem:[%s5 + $0xf0] sm:$0xff] %vm669, %v501
  %701 = vst.msk [vmem:[%s5 + $0xf8] sm:$0xff] %vm669, %v506
  %702 = vst.msk [vmem:[%s5 + $0x100] sm:$0xff] %vm669, %v511
  %703 = vst.msk [vmem:[%s5 + $0x108] sm:$0xff] %vm669, %v516
  %704 = vst.msk [vmem:[%s5 + $0x110] sm:$0xff] %vm669, %v521
  %705 = vst.msk [vmem:[%s5 + $0x118] sm:$0xff] %vm669, %v526
  %706 = vst.msk [vmem:[%s5 + $0x120] sm:$0xff] %vm669, %v531
  %707 = vst.msk [vmem:[%s5 + $0x128] sm:$0xff] %vm669, %v536
  %708 = vst.msk [vmem:[%s5 + $0x130] sm:$0xff] %vm669, %v541
  %709 = vst.msk [vmem:[%s5 + $0x138] sm:$0xff] %vm669, %v546
  %710 = vst.msk [vmem:[%s5 + $0x140] sm:$0xff] %vm669, %v551
  %711 = vst.msk [vmem:[%s5 + $0x148] sm:$0xff] %vm669, %v556
  %712 = vst.msk [vmem:[%s5 + $0x150] sm:$0xff] %vm669, %v561
  %713 = vst.msk [vmem:[%s5 + $0x158] sm:$0xff] %vm669, %v566
  %714 = vst.msk [vmem:[%s5 + $0x160] sm:$0xff] %vm669, %v571
  %715 = vst.msk [vmem:[%s5 + $0x168] sm:$0xff] %vm669, %v576
  %716 = vst.msk [vmem:[%s5 + $0x170] sm:$0xff] %vm669, %v581
  %717 = vst.msk [vmem:[%s5 + $0x178] sm:$0xff] %vm669, %v586
  %718 = vst.msk [vmem:[%s5 + $0x180] sm:$0xff] %vm669, %v591
  %719 = vst.msk [vmem:[%s5 + $0x188] sm:$0xff] %vm669, %v596
  %720 = vst.msk [vmem:[%s5 + $0x190] sm:$0xff] %vm669, %v601
  %721 = vst.msk [vmem:[%s5 + $0x198] sm:$0xff] %vm669, %v606
  %722 = vst.msk [vmem:[%s5 + $0x1a0] sm:$0xff] %vm669, %v611
  %723 = vst.msk [vmem:[%s5 + $0x1a8] sm:$0xff] %vm669, %v616
  %724 = vst.msk [vmem:[%s5 + $0x1b0] sm:$0xff] %vm669, %v621
  %725 = vst.msk [vmem:[%s5 + $0x1b8] sm:$0xff] %vm669, %v626
  %726 = vst.msk [vmem:[%s5 + $0x1c0] sm:$0xff] %vm669, %v631
  %727 = vst.msk [vmem:[%s5 + $0x1c8] sm:$0xff] %vm669, %v636
  %728 = vst.msk [vmem:[%s5 + $0x1d0] sm:$0xff] %vm669, %v641
  %729 = vst.msk [vmem:[%s5 + $0x1d8] sm:$0xff] %vm669, %v646
  %730 = vst.msk [vmem:[%s5 + $0x1e0] sm:$0xff] %vm669, %v651
  %731 = vst.msk [vmem:[%s5 + $0x1e8] sm:$0xff] %vm669, %v656
  %732 = vst.msk [vmem:[%s5 + $0x1f0] sm:$0xff] %vm669, %v661
  %733 = vst.msk [vmem:[%s5 + $0x1f8] sm:$0xff] %vm669, %v666
  %v734 = vld [vmem:[%s2] sm:$0xf]
  %v736 = vsel %vm280, %v734, 0
  %738 = vmatprep.subr.mxu0 0.0
  %739 = vmatpush1.msra.mxu0 0.0
  %740 = vmatprep.subr.mxu0 0.0
  %741 = vmatpush1.msra.mxu0 0.0
  %742 = vmatprep.subr.mxu0 0.0
  %743 = vmatpush1.msra.mxu0 0.0
  %744 = vmatprep.subr.mxu0 0.0
  %745 = vmatpush1.msra.mxu0 0.0
  %746 = vmatprep.subr.mxu0 0.0
  %747 = vmatpush1.msra.mxu0 0.0
  %748 = vmatprep.subr.mxu0 0.0
  %749 = vmatpush1.msra.mxu0 0.0
  %750 = vmatprep.subr.mxu0 0.0
  %751 = vmatpush1.msra.mxu0 0.0
  %752 = vmatprep.subr.mxu0 0.0
  %753 = vmatpush1.msra.mxu0 0.0
  %754 = vmatprep.subr.mxu0 0.0
  %755 = vmatpush1.msra.mxu0 0.0
  %756 = vmatprep.subr.mxu0 0.0
  %757 = vmatpush1.msra.mxu0 0.0
  %758 = vmatprep.subr.mxu0 0.0
  %759 = vmatpush1.msra.mxu0 0.0
  %760 = vmatprep.subr.mxu0 0.0
  %761 = vmatpush1.msra.mxu0 0.0
  %762 = vmatprep.subr.mxu0 0.0
  %763 = vmatpush1.msra.mxu0 0.0
  %764 = vmatprep.subr.mxu0 0.0
  %765 = vmatpush1.msra.mxu0 0.0
  %766 = vmatprep.subr.mxu0 0.0
  %767 = vmatpush1.msra.mxu0 0.0
  %768 = vmatprep.subr.mxu0 0.0
  %769 = vmatpush1.msra.mxu0 %v736
  %770 = vmatprep.subr.mxu0 0.0
  %771 = vmatpush2.msra.mxu0 0.0
  %772 = vmatprep.subr.mxu0 0.0
  %773 = vmatpush2.msra.mxu0 0.0
  %774 = vmatprep.subr.mxu0 0.0
  %775 = vmatpush2.msra.mxu0 0.0
  %776 = vmatprep.subr.mxu0 0.0
  %777 = vmatpush2.msra.mxu0 0.0
  %778 = vmatprep.subr.mxu0 0.0
  %779 = vmatpush2.msra.mxu0 0.0
  %780 = vmatprep.subr.mxu0 0.0
  %781 = vmatpush2.msra.mxu0 0.0
  %782 = vmatprep.subr.mxu0 0.0
  %783 = vmatpush2.msra.mxu0 0.0
  %784 = vmatprep.subr.mxu0 0.0
  %785 = vmatpush2.msra.mxu0 0.0
  %786 = vmatprep.subr.mxu0 0.0
  %787 = vmatpush2.msra.mxu0 0.0
  %788 = vmatprep.subr.mxu0 0.0
  %789 = vmatpush2.msra.mxu0 0.0
  %790 = vmatprep.subr.mxu0 0.0
  %791 = vmatpush2.msra.mxu0 0.0
  %792 = vmatprep.subr.mxu0 0.0
  %793 = vmatpush2.msra.mxu0 0.0
  %794 = vmatprep.subr.mxu0 0.0
  %795 = vmatpush2.msra.mxu0 0.0
  %796 = vmatprep.subr.mxu0 0.0
  %797 = vmatpush2.msra.mxu0 0.0
  %798 = vmatprep.subr.mxu0 0.0
  %799 = vmatpush2.msra.mxu0 0.0
  %800 = vmatprep.subr.mxu0 0.0
  %801 = vmatpush2.msra.mxu0 0.0
  %802 = vmatprep.mubr.f32.mxu0 0.0
  %803 = vmatmul.mubr.f32.gmra.mxu0 %v89
  %v804 = vpop.f32.mrf.mxu0
  %v805 = vadd.f32 0.0, %v804
  %v806 = vpop.f32.mrf.mxu0
  %807 = vmatprep.mubr.f32.mxu0 0.0
  %808 = vmatmul.mubr.f32.gmra.mxu0 %v92
  %v809 = vpop.f32.mrf.mxu0
  %v810 = vadd.f32 0.0, %v809
  %v811 = vpop.f32.mrf.mxu0
  %812 = vmatprep.mubr.f32.mxu0 0.0
  %813 = vmatmul.mubr.f32.gmra.mxu0 %v95
  %v814 = vpop.f32.mrf.mxu0
  %v815 = vadd.f32 0.0, %v814
  %v816 = vpop.f32.mrf.mxu0
  %817 = vmatprep.mubr.f32.mxu0 0.0
  %818 = vmatmul.mubr.f32.gmra.mxu0 %v98
  %v819 = vpop.f32.mrf.mxu0
  %v820 = vadd.f32 0.0, %v819
  %v821 = vpop.f32.mrf.mxu0
  %822 = vmatprep.mubr.f32.mxu0 0.0
  %823 = vmatmul.mubr.f32.gmra.mxu0 %v101
  %v824 = vpop.f32.mrf.mxu0
  %v825 = vadd.f32 0.0, %v824
  %v826 = vpop.f32.mrf.mxu0
  %827 = vmatprep.mubr.f32.mxu0 0.0
  %828 = vmatmul.mubr.f32.gmra.mxu0 %v104
  %v829 = vpop.f32.mrf.mxu0
  %v830 = vadd.f32 0.0, %v829
  %v831 = vpop.f32.mrf.mxu0
  %832 = vmatprep.mubr.f32.mxu0 0.0
  %833 = vmatmul.mubr.f32.gmra.mxu0 %v107
  %v834 = vpop.f32.mrf.mxu0
  %v835 = vadd.f32 0.0, %v834
  %v836 = vpop.f32.mrf.mxu0
  %837 = vmatprep.mubr.f32.mxu0 0.0
  %838 = vmatmul.mubr.f32.gmra.mxu0 %v110
  %v839 = vpop.f32.mrf.mxu0
  %v840 = vadd.f32 0.0, %v839
  %v841 = vpop.f32.mrf.mxu0
  %842 = vmatprep.mubr.f32.mxu0 0.0
  %843 = vmatmul.mubr.f32.gmra.mxu0 %v113
  %v844 = vpop.f32.mrf.mxu0
  %v845 = vadd.f32 0.0, %v844
  %v846 = vpop.f32.mrf.mxu0
  %847 = vmatprep.mubr.f32.mxu0 0.0
  %848 = vmatmul.mubr.f32.gmra.mxu0 %v116
  %v849 = vpop.f32.mrf.mxu0
  %v850 = vadd.f32 0.0, %v849
  %v851 = vpop.f32.mrf.mxu0
  %852 = vmatprep.mubr.f32.mxu0 0.0
  %853 = vmatmul.mubr.f32.gmra.mxu0 %v119
  %v854 = vpop.f32.mrf.mxu0
  %v855 = vadd.f32 0.0, %v854
  %v856 = vpop.f32.mrf.mxu0
  %857 = vmatprep.mubr.f32.mxu0 0.0
  %858 = vmatmul.mubr.f32.gmra.mxu0 %v122
  %v859 = vpop.f32.mrf.mxu0
  %v860 = vadd.f32 0.0, %v859
  %v861 = vpop.f32.mrf.mxu0
  %862 = vmatprep.mubr.f32.mxu0 0.0
  %863 = vmatmul.mubr.f32.gmra.mxu0 %v125
  %v864 = vpop.f32.mrf.mxu0
  %v865 = vadd.f32 0.0, %v864
  %v866 = vpop.f32.mrf.mxu0
  %867 = vmatprep.mubr.f32.mxu0 0.0
  %868 = vmatmul.mubr.f32.gmra.mxu0 %v128
  %v869 = vpop.f32.mrf.mxu0
  %v870 = vadd.f32 0.0, %v869
  %v871 = vpop.f32.mrf.mxu0
  %872 = vmatprep.mubr.f32.mxu0 0.0
  %873 = vmatmul.mubr.f32.gmra.mxu0 %v131
  %v874 = vpop.f32.mrf.mxu0
  %v875 = vadd.f32 0.0, %v874
  %v876 = vpop.f32.mrf.mxu0
  %877 = vmatprep.mubr.f32.mxu0 0.0
  %878 = vmatmul.mubr.f32.gmra.mxu0 %v134
  %v879 = vpop.f32.mrf.mxu0
  %v880 = vadd.f32 0.0, %v879
  %v881 = vpop.f32.mrf.mxu0
  %882 = vmatprep.mubr.f32.mxu0 0.0
  %883 = vmatmul.mubr.f32.gmra.mxu0 %v137
  %v884 = vpop.f32.mrf.mxu0
  %v885 = vadd.f32 0.0, %v884
  %v886 = vpop.f32.mrf.mxu0
  %887 = vmatprep.mubr.f32.mxu0 0.0
  %888 = vmatmul.mubr.f32.gmra.mxu0 %v140
  %v889 = vpop.f32.mrf.mxu0
  %v890 = vadd.f32 0.0, %v889
  %v891 = vpop.f32.mrf.mxu0
  %892 = vmatprep.mubr.f32.mxu0 0.0
  %893 = vmatmul.mubr.f32.gmra.mxu0 %v143
  %v894 = vpop.f32.mrf.mxu0
  %v895 = vadd.f32 0.0, %v894
  %v896 = vpop.f32.mrf.mxu0
  %897 = vmatprep.mubr.f32.mxu0 0.0
  %898 = vmatmul.mubr.f32.gmra.mxu0 %v146
  %v899 = vpop.f32.mrf.mxu0
  %v900 = vadd.f32 0.0, %v899
  %v901 = vpop.f32.mrf.mxu0
  %902 = vmatprep.mubr.f32.mxu0 0.0
  %903 = vmatmul.mubr.f32.gmra.mxu0 %v149
  %v904 = vpop.f32.mrf.mxu0
  %v905 = vadd.f32 0.0, %v904
  %v906 = vpop.f32.mrf.mxu0
  %907 = vmatprep.mubr.f32.mxu0 0.0
  %908 = vmatmul.mubr.f32.gmra.mxu0 %v152
  %v909 = vpop.f32.mrf.mxu0
  %v910 = vadd.f32 0.0, %v909
  %v911 = vpop.f32.mrf.mxu0
  %912 = vmatprep.mubr.f32.mxu0 0.0
  %913 = vmatmul.mubr.f32.gmra.mxu0 %v155
  %v914 = vpop.f32.mrf.mxu0
  %v915 = vadd.f32 0.0, %v914
  %v916 = vpop.f32.mrf.mxu0
  %917 = vmatprep.mubr.f32.mxu0 0.0
  %918 = vmatmul.mubr.f32.gmra.mxu0 %v158
  %v919 = vpop.f32.mrf.mxu0
  %v920 = vadd.f32 0.0, %v919
  %v921 = vpop.f32.mrf.mxu0
  %922 = vmatprep.mubr.f32.mxu0 0.0
  %923 = vmatmul.mubr.f32.gmra.mxu0 %v161
  %v924 = vpop.f32.mrf.mxu0
  %v925 = vadd.f32 0.0, %v924
  %v926 = vpop.f32.mrf.mxu0
  %927 = vmatprep.mubr.f32.mxu0 0.0
  %928 = vmatmul.mubr.f32.gmra.mxu0 %v164
  %v929 = vpop.f32.mrf.mxu0
  %v930 = vadd.f32 0.0, %v929
  %v931 = vpop.f32.mrf.mxu0
  %932 = vmatprep.mubr.f32.mxu0 0.0
  %933 = vmatmul.mubr.f32.gmra.mxu0 %v167
  %v934 = vpop.f32.mrf.mxu0
  %v935 = vadd.f32 0.0, %v934
  %v936 = vpop.f32.mrf.mxu0
  %937 = vmatprep.mubr.f32.mxu0 0.0
  %938 = vmatmul.mubr.f32.gmra.mxu0 %v170
  %v939 = vpop.f32.mrf.mxu0
  %v940 = vadd.f32 0.0, %v939
  %v941 = vpop.f32.mrf.mxu0
  %942 = vmatprep.mubr.f32.mxu0 0.0
  %943 = vmatmul.mubr.f32.gmra.mxu0 %v173
  %v944 = vpop.f32.mrf.mxu0
  %v945 = vadd.f32 0.0, %v944
  %v946 = vpop.f32.mrf.mxu0
  %947 = vmatprep.mubr.f32.mxu0 0.0
  %948 = vmatmul.mubr.f32.gmra.mxu0 %v176
  %v949 = vpop.f32.mrf.mxu0
  %v950 = vadd.f32 0.0, %v949
  %v951 = vpop.f32.mrf.mxu0
  %952 = vmatprep.mubr.f32.mxu0 0.0
  %953 = vmatmul.mubr.f32.gmra.mxu0 %v179
  %v954 = vpop.f32.mrf.mxu0
  %v955 = vadd.f32 0.0, %v954
  %v956 = vpop.f32.mrf.mxu0
  %957 = vmatprep.mubr.f32.mxu0 0.0
  %958 = vmatmul.mubr.f32.gmra.mxu0 %v182
  %v959 = vpop.f32.mrf.mxu0
  %v960 = vadd.f32 0.0, %v959
  %v961 = vpop.f32.mrf.mxu0
  %962 = vmatprep.mubr.f32.mxu0 0.0
  %963 = vmatmul.mubr.f32.gmra.mxu0 %v185
  %v964 = vpop.f32.mrf.mxu0
  %v965 = vadd.f32 0.0, %v964
  %v966 = vpop.f32.mrf.mxu0
  %967 = vmatprep.mubr.f32.mxu0 0.0
  %968 = vmatmul.mubr.f32.gmra.mxu0 %v188
  %v969 = vpop.f32.mrf.mxu0
  %v970 = vadd.f32 0.0, %v969
  %v971 = vpop.f32.mrf.mxu0
  %972 = vmatprep.mubr.f32.mxu0 0.0
  %973 = vmatmul.mubr.f32.gmra.mxu0 %v191
  %v974 = vpop.f32.mrf.mxu0
  %v975 = vadd.f32 0.0, %v974
  %v976 = vpop.f32.mrf.mxu0
  %977 = vmatprep.mubr.f32.mxu0 0.0
  %978 = vmatmul.mubr.f32.gmra.mxu0 %v194
  %v979 = vpop.f32.mrf.mxu0
  %v980 = vadd.f32 0.0, %v979
  %v981 = vpop.f32.mrf.mxu0
  %982 = vmatprep.mubr.f32.mxu0 0.0
  %983 = vmatmul.mubr.f32.gmra.mxu0 %v197
  %v984 = vpop.f32.mrf.mxu0
  %v985 = vadd.f32 0.0, %v984
  %v986 = vpop.f32.mrf.mxu0
  %987 = vmatprep.mubr.f32.mxu0 0.0
  %988 = vmatmul.mubr.f32.gmra.mxu0 %v200
  %v989 = vpop.f32.mrf.mxu0
  %v990 = vadd.f32 0.0, %v989
  %v991 = vpop.f32.mrf.mxu0
  %992 = vmatprep.mubr.f32.mxu0 0.0
  %993 = vmatmul.mubr.f32.gmra.mxu0 %v203
  %v994 = vpop.f32.mrf.mxu0
  %v995 = vadd.f32 0.0, %v994
  %v996 = vpop.f32.mrf.mxu0
  %997 = vmatprep.mubr.f32.mxu0 0.0
  %998 = vmatmul.mubr.f32.gmra.mxu0 %v206
  %v999 = vpop.f32.mrf.mxu0
  %v1000 = vadd.f32 0.0, %v999
  %v1001 = vpop.f32.mrf.mxu0
  %1002 = vmatprep.mubr.f32.mxu0 0.0
  %1003 = vmatmul.mubr.f32.gmra.mxu0 %v209
  %v1004 = vpop.f32.mrf.mxu0
  %v1005 = vadd.f32 0.0, %v1004
  %v1006 = vpop.f32.mrf.mxu0
  %1007 = vmatprep.mubr.f32.mxu0 0.0
  %1008 = vmatmul.mubr.f32.gmra.mxu0 %v212
  %v1009 = vpop.f32.mrf.mxu0
  %v1010 = vadd.f32 0.0, %v1009
  %v1011 = vpop.f32.mrf.mxu0
  %1012 = vmatprep.mubr.f32.mxu0 0.0
  %1013 = vmatmul.mubr.f32.gmra.mxu0 %v215
  %v1014 = vpop.f32.mrf.mxu0
  %v1015 = vadd.f32 0.0, %v1014
  %v1016 = vpop.f32.mrf.mxu0
  %1017 = vmatprep.mubr.f32.mxu0 0.0
  %1018 = vmatmul.mubr.f32.gmra.mxu0 %v218
  %v1019 = vpop.f32.mrf.mxu0
  %v1020 = vadd.f32 0.0, %v1019
  %v1021 = vpop.f32.mrf.mxu0
  %1022 = vmatprep.mubr.f32.mxu0 0.0
  %1023 = vmatmul.mubr.f32.gmra.mxu0 %v221
  %v1024 = vpop.f32.mrf.mxu0
  %v1025 = vadd.f32 0.0, %v1024
  %v1026 = vpop.f32.mrf.mxu0
  %1027 = vmatprep.mubr.f32.mxu0 0.0
  %1028 = vmatmul.mubr.f32.gmra.mxu0 %v224
  %v1029 = vpop.f32.mrf.mxu0
  %v1030 = vadd.f32 0.0, %v1029
  %v1031 = vpop.f32.mrf.mxu0
  %1032 = vmatprep.mubr.f32.mxu0 0.0
  %1033 = vmatmul.mubr.f32.gmra.mxu0 %v227
  %v1034 = vpop.f32.mrf.mxu0
  %v1035 = vadd.f32 0.0, %v1034
  %v1036 = vpop.f32.mrf.mxu0
  %1037 = vmatprep.mubr.f32.mxu0 0.0
  %1038 = vmatmul.mubr.f32.gmra.mxu0 %v230
  %v1039 = vpop.f32.mrf.mxu0
  %v1040 = vadd.f32 0.0, %v1039
  %v1041 = vpop.f32.mrf.mxu0
  %1042 = vmatprep.mubr.f32.mxu0 0.0
  %1043 = vmatmul.mubr.f32.gmra.mxu0 %v233
  %v1044 = vpop.f32.mrf.mxu0
  %v1045 = vadd.f32 0.0, %v1044
  %v1046 = vpop.f32.mrf.mxu0
  %1047 = vmatprep.mubr.f32.mxu0 0.0
  %1048 = vmatmul.mubr.f32.gmra.mxu0 %v236
  %v1049 = vpop.f32.mrf.mxu0
  %v1050 = vadd.f32 0.0, %v1049
  %v1051 = vpop.f32.mrf.mxu0
  %1052 = vmatprep.mubr.f32.mxu0 0.0
  %1053 = vmatmul.mubr.f32.gmra.mxu0 %v239
  %v1054 = vpop.f32.mrf.mxu0
  %v1055 = vadd.f32 0.0, %v1054
  %v1056 = vpop.f32.mrf.mxu0
  %1057 = vmatprep.mubr.f32.mxu0 0.0
  %1058 = vmatmul.mubr.f32.gmra.mxu0 %v242
  %v1059 = vpop.f32.mrf.mxu0
  %v1060 = vadd.f32 0.0, %v1059
  %v1061 = vpop.f32.mrf.mxu0
  %1062 = vmatprep.mubr.f32.mxu0 0.0
  %1063 = vmatmul.mubr.f32.gmra.mxu0 %v245
  %v1064 = vpop.f32.mrf.mxu0
  %v1065 = vadd.f32 0.0, %v1064
  %v1066 = vpop.f32.mrf.mxu0
  %1067 = vmatprep.mubr.f32.mxu0 0.0
  %1068 = vmatmul.mubr.f32.gmra.mxu0 %v248
  %v1069 = vpop.f32.mrf.mxu0
  %v1070 = vadd.f32 0.0, %v1069
  %v1071 = vpop.f32.mrf.mxu0
  %1072 = vmatprep.mubr.f32.mxu0 0.0
  %1073 = vmatmul.mubr.f32.gmra.mxu0 %v251
  %v1074 = vpop.f32.mrf.mxu0
  %v1075 = vadd.f32 0.0, %v1074
  %v1076 = vpop.f32.mrf.mxu0
  %1077 = vmatprep.mubr.f32.mxu0 0.0
  %1078 = vmatmul.mubr.f32.gmra.mxu0 %v254
  %v1079 = vpop.f32.mrf.mxu0
  %v1080 = vadd.f32 0.0, %v1079
  %v1081 = vpop.f32.mrf.mxu0
  %1082 = vmatprep.mubr.f32.mxu0 0.0
  %1083 = vmatmul.mubr.f32.gmra.mxu0 %v257
  %v1084 = vpop.f32.mrf.mxu0
  %v1085 = vadd.f32 0.0, %v1084
  %v1086 = vpop.f32.mrf.mxu0
  %1087 = vmatprep.mubr.f32.mxu0 0.0
  %1088 = vmatmul.mubr.f32.gmra.mxu0 %v260
  %v1089 = vpop.f32.mrf.mxu0
  %v1090 = vadd.f32 0.0, %v1089
  %v1091 = vpop.f32.mrf.mxu0
  %1092 = vmatprep.mubr.f32.mxu0 0.0
  %1093 = vmatmul.mubr.f32.gmra.mxu0 %v263
  %v1094 = vpop.f32.mrf.mxu0
  %v1095 = vadd.f32 0.0, %v1094
  %v1096 = vpop.f32.mrf.mxu0
  %1097 = vmatprep.mubr.f32.mxu0 0.0
  %1098 = vmatmul.mubr.f32.gmra.mxu0 %v266
  %v1099 = vpop.f32.mrf.mxu0
  %v1100 = vadd.f32 0.0, %v1099
  %v1101 = vpop.f32.mrf.mxu0
  %1102 = vmatprep.mubr.f32.mxu0 0.0
  %1103 = vmatmul.mubr.f32.gmra.mxu0 %v269
  %v1104 = vpop.f32.mrf.mxu0
  %v1105 = vadd.f32 0.0, %v1104
  %v1106 = vpop.f32.mrf.mxu0
  %1107 = vmatprep.mubr.f32.mxu0 0.0
  %1108 = vmatmul.mubr.f32.gmra.mxu0 %v272
  %v1109 = vpop.f32.mrf.mxu0
  %v1110 = vadd.f32 0.0, %v1109
  %v1111 = vpop.f32.mrf.mxu0
  %1112 = vmatprep.mubr.f32.mxu0 0.0
  %1113 = vmatmul.mubr.f32.gmra.mxu0 %v275
  %v1114 = vpop.f32.mrf.mxu0
  %v1115 = vadd.f32 0.0, %v1114
  %v1116 = vpop.f32.mrf.mxu0
  %1117 = vmatprep.mubr.f32.mxu0 0.0
  %1118 = vmatmul.mubr.f32.gmra.mxu0 %v278
  %v1119 = vpop.f32.mrf.mxu0
  %v1120 = vadd.f32 0.0, %v1119
  %v1121 = vpop.f32.mrf.mxu0
  %1122 = vdwg.mxu0
  %v1123 = vld [vmem:[%s3] sm:$0x1]
  %v1125 = vlaneseq
  %v1126 = vshrl.u32 %v1125, 7
  %v1127 = vsub.s32 0, %v1126
  %v1128 = vrot.slane %v1123, %v1127
  %v1130 = vmul.f32 %v805, %v1128
  %v1131 = vmul.f32 %v810, %v1128
  %v1132 = vmul.f32 %v815, %v1128
  %v1133 = vmul.f32 %v820, %v1128
  %v1134 = vmul.f32 %v825, %v1128
  %v1135 = vmul.f32 %v830, %v1128
  %v1136 = vmul.f32 %v835, %v1128
  %v1137 = vmul.f32 %v840, %v1128
  %v1138 = vmul.f32 %v845, %v1128
  %v1139 = vmul.f32 %v850, %v1128
  %v1140 = vmul.f32 %v855, %v1128
  %v1141 = vmul.f32 %v860, %v1128
  %v1142 = vmul.f32 %v865, %v1128
  %v1143 = vmul.f32 %v870, %v1128
  %v1144 = vmul.f32 %v875, %v1128
  %v1145 = vmul.f32 %v880, %v1128
  %v1146 = vmul.f32 %v885, %v1128
  %v1147 = vmul.f32 %v890, %v1128
  %v1148 = vmul.f32 %v895, %v1128
  %v1149 = vmul.f32 %v900, %v1128
  %v1150 = vmul.f32 %v905, %v1128
  %v1151 = vmul.f32 %v910, %v1128
  %v1152 = vmul.f32 %v915, %v1128
  %v1153 = vmul.f32 %v920, %v1128
  %v1154 = vmul.f32 %v925, %v1128
  %v1155 = vmul.f32 %v930, %v1128
  %v1156 = vmul.f32 %v935, %v1128
  %v1157 = vmul.f32 %v940, %v1128
  %v1158 = vmul.f32 %v945, %v1128
  %v1159 = vmul.f32 %v950, %v1128
  %v1160 = vmul.f32 %v955, %v1128
  %v1161 = vmul.f32 %v960, %v1128
  %v1162 = vmul.f32 %v965, %v1128
  %v1163 = vmul.f32 %v970, %v1128
  %v1164 = vmul.f32 %v975, %v1128
  %v1165 = vmul.f32 %v980, %v1128
  %v1166 = vmul.f32 %v985, %v1128
  %v1167 = vmul.f32 %v990, %v1128
  %v1168 = vmul.f32 %v995, %v1128
  %v1169 = vmul.f32 %v1000, %v1128
  %v1170 = vmul.f32 %v1005, %v1128
  %v1171 = vmul.f32 %v1010, %v1128
  %v1172 = vmul.f32 %v1015, %v1128
  %v1173 = vmul.f32 %v1020, %v1128
  %v1174 = vmul.f32 %v1025, %v1128
  %v1175 = vmul.f32 %v1030, %v1128
  %v1176 = vmul.f32 %v1035, %v1128
  %v1177 = vmul.f32 %v1040, %v1128
  %v1178 = vmul.f32 %v1045, %v1128
  %v1179 = vmul.f32 %v1050, %v1128
  %v1180 = vmul.f32 %v1055, %v1128
  %v1181 = vmul.f32 %v1060, %v1128
  %v1182 = vmul.f32 %v1065, %v1128
  %v1183 = vmul.f32 %v1070, %v1128
  %v1184 = vmul.f32 %v1075, %v1128
  %v1185 = vmul.f32 %v1080, %v1128
  %v1186 = vmul.f32 %v1085, %v1128
  %v1187 = vmul.f32 %v1090, %v1128
  %v1188 = vmul.f32 %v1095, %v1128
  %v1189 = vmul.f32 %v1100, %v1128
  %v1190 = vmul.f32 %v1105, %v1128
  %v1191 = vmul.f32 %v1110, %v1128
  %v1192 = vmul.f32 %v1115, %v1128
  %v1193 = vmul.f32 %v1120, %v1128
  %v1194 = vld [vmem:[%s4] sm:$0x1]
  %v1196 = vlaneseq
  %v1197 = vshrl.u32 %v1196, 7
  %v1198 = vsub.s32 0, %v1197
  %v1199 = vrot.slane %v1194, %v1198
  %v1201 = vadd.f32 %v1130, %v1199
  %v1202 = vadd.f32 %v1131, %v1199
  %v1203 = vadd.f32 %v1132, %v1199
  %v1204 = vadd.f32 %v1133, %v1199
  %v1205 = vadd.f32 %v1134, %v1199
  %v1206 = vadd.f32 %v1135, %v1199
  %v1207 = vadd.f32 %v1136, %v1199
  %v1208 = vadd.f32 %v1137, %v1199
  %v1209 = vadd.f32 %v1138, %v1199
  %v1210 = vadd.f32 %v1139, %v1199
  %v1211 = vadd.f32 %v1140, %v1199
  %v1212 = vadd.f32 %v1141, %v1199
  %v1213 = vadd.f32 %v1142, %v1199
  %v1214 = vadd.f32 %v1143, %v1199
  %v1215 = vadd.f32 %v1144, %v1199
  %v1216 = vadd.f32 %v1145, %v1199
  %v1217 = vadd.f32 %v1146, %v1199
  %v1218 = vadd.f32 %v1147, %v1199
  %v1219 = vadd.f32 %v1148, %v1199
  %v1220 = vadd.f32 %v1149, %v1199
  %v1221 = vadd.f32 %v1150, %v1199
  %v1222 = vadd.f32 %v1151, %v1199
  %v1223 = vadd.f32 %v1152, %v1199
  %v1224 = vadd.f32 %v1153, %v1199
  %v1225 = vadd.f32 %v1154, %v1199
  %v1226 = vadd.f32 %v1155, %v1199
  %v1227 = vadd.f32 %v1156, %v1199
  %v1228 = vadd.f32 %v1157, %v1199
  %v1229 = vadd.f32 %v1158, %v1199
  %v1230 = vadd.f32 %v1159, %v1199
  %v1231 = vadd.f32 %v1160, %v1199
  %v1232 = vadd.f32 %v1161, %v1199
  %v1233 = vadd.f32 %v1162, %v1199
  %v1234 = vadd.f32 %v1163, %v1199
  %v1235 = vadd.f32 %v1164, %v1199
  %v1236 = vadd.f32 %v1165, %v1199
  %v1237 = vadd.f32 %v1166, %v1199
  %v1238 = vadd.f32 %v1167, %v1199
  %v1239 = vadd.f32 %v1168, %v1199
  %v1240 = vadd.f32 %v1169, %v1199
  %v1241 = vadd.f32 %v1170, %v1199
  %v1242 = vadd.f32 %v1171, %v1199
  %v1243 = vadd.f32 %v1172, %v1199
  %v1244 = vadd.f32 %v1173, %v1199
  %v1245 = vadd.f32 %v1174, %v1199
  %v1246 = vadd.f32 %v1175, %v1199
  %v1247 = vadd.f32 %v1176, %v1199
  %v1248 = vadd.f32 %v1177, %v1199
  %v1249 = vadd.f32 %v1178, %v1199
  %v1250 = vadd.f32 %v1179, %v1199
  %v1251 = vadd.f32 %v1180, %v1199
  %v1252 = vadd.f32 %v1181, %v1199
  %v1253 = vadd.f32 %v1182, %v1199
  %v1254 = vadd.f32 %v1183, %v1199
  %v1255 = vadd.f32 %v1184, %v1199
  %v1256 = vadd.f32 %v1185, %v1199
  %v1257 = vadd.f32 %v1186, %v1199
  %v1258 = vadd.f32 %v1187, %v1199
  %v1259 = vadd.f32 %v1188, %v1199
  %v1260 = vadd.f32 %v1189, %v1199
  %v1261 = vadd.f32 %v1190, %v1199
  %v1262 = vadd.f32 %v1191, %v1199
  %v1263 = vadd.f32 %v1192, %v1199
  %v1264 = vadd.f32 %v1193, %v1199
  %v1265 = vmax.f32 %v1201, 0.0
  %v1266 = vmax.f32 %v1202, 0.0
  %v1267 = vmax.f32 %v1203, 0.0
  %v1268 = vmax.f32 %v1204, 0.0
  %v1269 = vmax.f32 %v1205, 0.0
  %v1270 = vmax.f32 %v1206, 0.0
  %v1271 = vmax.f32 %v1207, 0.0
  %v1272 = vmax.f32 %v1208, 0.0
  %v1273 = vmax.f32 %v1209, 0.0
  %v1274 = vmax.f32 %v1210, 0.0
  %v1275 = vmax.f32 %v1211, 0.0
  %v1276 = vmax.f32 %v1212, 0.0
  %v1277 = vmax.f32 %v1213, 0.0
  %v1278 = vmax.f32 %v1214, 0.0
  %v1279 = vmax.f32 %v1215, 0.0
  %v1280 = vmax.f32 %v1216, 0.0
  %v1281 = vmax.f32 %v1217, 0.0
  %v1282 = vmax.f32 %v1218, 0.0
  %v1283 = vmax.f32 %v1219, 0.0
  %v1284 = vmax.f32 %v1220, 0.0
  %v1285 = vmax.f32 %v1221, 0.0
  %v1286 = vmax.f32 %v1222, 0.0
  %v1287 = vmax.f32 %v1223, 0.0
  %v1288 = vmax.f32 %v1224, 0.0
  %v1289 = vmax.f32 %v1225, 0.0
  %v1290 = vmax.f32 %v1226, 0.0
  %v1291 = vmax.f32 %v1227, 0.0
  %v1292 = vmax.f32 %v1228, 0.0
  %v1293 = vmax.f32 %v1229, 0.0
  %v1294 = vmax.f32 %v1230, 0.0
  %v1295 = vmax.f32 %v1231, 0.0
  %v1296 = vmax.f32 %v1232, 0.0
  %v1297 = vmax.f32 %v1233, 0.0
  %v1298 = vmax.f32 %v1234, 0.0
  %v1299 = vmax.f32 %v1235, 0.0
  %v1300 = vmax.f32 %v1236, 0.0
  %v1301 = vmax.f32 %v1237, 0.0
  %v1302 = vmax.f32 %v1238, 0.0
  %v1303 = vmax.f32 %v1239, 0.0
  %v1304 = vmax.f32 %v1240, 0.0
  %v1305 = vmax.f32 %v1241, 0.0
  %v1306 = vmax.f32 %v1242, 0.0
  %v1307 = vmax.f32 %v1243, 0.0
  %v1308 = vmax.f32 %v1244, 0.0
  %v1309 = vmax.f32 %v1245, 0.0
  %v1310 = vmax.f32 %v1246, 0.0
  %v1311 = vmax.f32 %v1247, 0.0
  %v1312 = vmax.f32 %v1248, 0.0
  %v1313 = vmax.f32 %v1249, 0.0
  %v1314 = vmax.f32 %v1250, 0.0
  %v1315 = vmax.f32 %v1251, 0.0
  %v1316 = vmax.f32 %v1252, 0.0
  %v1317 = vmax.f32 %v1253, 0.0
  %v1318 = vmax.f32 %v1254, 0.0
  %v1319 = vmax.f32 %v1255, 0.0
  %v1320 = vmax.f32 %v1256, 0.0
  %v1321 = vmax.f32 %v1257, 0.0
  %v1322 = vmax.f32 %v1258, 0.0
  %v1323 = vmax.f32 %v1259, 0.0
  %v1324 = vmax.f32 %v1260, 0.0
  %v1325 = vmax.f32 %v1261, 0.0
  %v1326 = vmax.f32 %v1262, 0.0
  %v1327 = vmax.f32 %v1263, 0.0
  %v1328 = vmax.f32 %v1264, 0.0
  %1329 = vst.msk [vmem:[%s6] sm:$0xff] %vm87, %v1265
  %1330 = vst.msk [vmem:[%s6 + $0x8] sm:$0xff] %vm87, %v1266
  %1331 = vst.msk [vmem:[%s6 + $0x10] sm:$0xff] %vm87, %v1267
  %1332 = vst.msk [vmem:[%s6 + $0x18] sm:$0xff] %vm87, %v1268
  %1333 = vst.msk [vmem:[%s6 + $0x20] sm:$0xff] %vm87, %v1269
  %1334 = vst.msk [vmem:[%s6 + $0x28] sm:$0xff] %vm87, %v1270
  %1335 = vst.msk [vmem:[%s6 + $0x30] sm:$0xff] %vm87, %v1271
  %1336 = vst.msk [vmem:[%s6 + $0x38] sm:$0xff] %vm87, %v1272
  %1337 = vst.msk [vmem:[%s6 + $0x40] sm:$0xff] %vm87, %v1273
  %1338 = vst.msk [vmem:[%s6 + $0x48] sm:$0xff] %vm87, %v1274
  %1339 = vst.msk [vmem:[%s6 + $0x50] sm:$0xff] %vm87, %v1275
  %1340 = vst.msk [vmem:[%s6 + $0x58] sm:$0xff] %vm87, %v1276
  %1341 = vst.msk [vmem:[%s6 + $0x60] sm:$0xff] %vm87, %v1277
  %1342 = vst.msk [vmem:[%s6 + $0x68] sm:$0xff] %vm87, %v1278
  %1343 = vst.msk [vmem:[%s6 + $0x70] sm:$0xff] %vm87, %v1279
  %1344 = vst.msk [vmem:[%s6 + $0x78] sm:$0xff] %vm87, %v1280
  %1345 = vst.msk [vmem:[%s6 + $0x80] sm:$0xff] %vm87, %v1281
  %1346 = vst.msk [vmem:[%s6 + $0x88] sm:$0xff] %vm87, %v1282
  %1347 = vst.msk [vmem:[%s6 + $0x90] sm:$0xff] %vm87, %v1283
  %1348 = vst.msk [vmem:[%s6 + $0x98] sm:$0xff] %vm87, %v1284
  %1349 = vst.msk [vmem:[%s6 + $0xa0] sm:$0xff] %vm87, %v1285
  %1350 = vst.msk [vmem:[%s6 + $0xa8] sm:$0xff] %vm87, %v1286
  %1351 = vst.msk [vmem:[%s6 + $0xb0] sm:$0xff] %vm87, %v1287
  %1352 = vst.msk [vmem:[%s6 + $0xb8] sm:$0xff] %vm87, %v1288
  %1353 = vst.msk [vmem:[%s6 + $0xc0] sm:$0xff] %vm87, %v1289
  %1354 = vst.msk [vmem:[%s6 + $0xc8] sm:$0xff] %vm87, %v1290
  %1355 = vst.msk [vmem:[%s6 + $0xd0] sm:$0xff] %vm87, %v1291
  %1356 = vst.msk [vmem:[%s6 + $0xd8] sm:$0xff] %vm87, %v1292
  %1357 = vst.msk [vmem:[%s6 + $0xe0] sm:$0xff] %vm87, %v1293
  %1358 = vst.msk [vmem:[%s6 + $0xe8] sm:$0xff] %vm87, %v1294
  %1359 = vst.msk [vmem:[%s6 + $0xf0] sm:$0xff] %vm87, %v1295
  %1360 = vst.msk [vmem:[%s6 + $0xf8] sm:$0xff] %vm87, %v1296
  %1361 = vst.msk [vmem:[%s6 + $0x100] sm:$0xff] %vm87, %v1297
  %1362 = vst.msk [vmem:[%s6 + $0x108] sm:$0xff] %vm87, %v1298
  %1363 = vst.msk [vmem:[%s6 + $0x110] sm:$0xff] %vm87, %v1299
  %1364 = vst.msk [vmem:[%s6 + $0x118] sm:$0xff] %vm87, %v1300
  %1365 = vst.msk [vmem:[%s6 + $0x120] sm:$0xff] %vm87, %v1301
  %1366 = vst.msk [vmem:[%s6 + $0x128] sm:$0xff] %vm87, %v1302
  %1367 = vst.msk [vmem:[%s6 + $0x130] sm:$0xff] %vm87, %v1303
  %1368 = vst.msk [vmem:[%s6 + $0x138] sm:$0xff] %vm87, %v1304
  %1369 = vst.msk [vmem:[%s6 + $0x140] sm:$0xff] %vm87, %v1305
  %1370 = vst.msk [vmem:[%s6 + $0x148] sm:$0xff] %vm87, %v1306
  %1371 = vst.msk [vmem:[%s6 + $0x150] sm:$0xff] %vm87, %v1307
  %1372 = vst.msk [vmem:[%s6 + $0x158] sm:$0xff] %vm87, %v1308
  %1373 = vst.msk [vmem:[%s6 + $0x160] sm:$0xff] %vm87, %v1309
  %1374 = vst.msk [vmem:[%s6 + $0x168] sm:$0xff] %vm87, %v1310
  %1375 = vst.msk [vmem:[%s6 + $0x170] sm:$0xff] %vm87, %v1311
  %1376 = vst.msk [vmem:[%s6 + $0x178] sm:$0xff] %vm87, %v1312
  %1377 = vst.msk [vmem:[%s6 + $0x180] sm:$0xff] %vm87, %v1313
  %1378 = vst.msk [vmem:[%s6 + $0x188] sm:$0xff] %vm87, %v1314
  %1379 = vst.msk [vmem:[%s6 + $0x190] sm:$0xff] %vm87, %v1315
  %1380 = vst.msk [vmem:[%s6 + $0x198] sm:$0xff] %vm87, %v1316
  %1381 = vst.msk [vmem:[%s6 + $0x1a0] sm:$0xff] %vm87, %v1317
  %1382 = vst.msk [vmem:[%s6 + $0x1a8] sm:$0xff] %vm87, %v1318
  %1383 = vst.msk [vmem:[%s6 + $0x1b0] sm:$0xff] %vm87, %v1319
  %1384 = vst.msk [vmem:[%s6 + $0x1b8] sm:$0xff] %vm87, %v1320
  %1385 = vst.msk [vmem:[%s6 + $0x1c0] sm:$0xff] %vm87, %v1321
  %1386 = vst.msk [vmem:[%s6 + $0x1c8] sm:$0xff] %vm87, %v1322
  %1387 = vst.msk [vmem:[%s6 + $0x1d0] sm:$0xff] %vm87, %v1323
  %1388 = vst.msk [vmem:[%s6 + $0x1d8] sm:$0xff] %vm87, %v1324
  %1389 = vst.msk [vmem:[%s6 + $0x1e0] sm:$0xff] %vm87, %v1325
  %1390 = vst.msk [vmem:[%s6 + $0x1e8] sm:$0xff] %vm87, %v1326
  %1391 = vst.msk [vmem:[%s6 + $0x1f0] sm:$0xff] %vm87, %v1327
  %1392 = vst.msk [vmem:[%s6 + $0x1f8] sm:$0xff] %vm87, %v1328
  // Predicated region
  $region22: #{tpu_custom_call.1} parent=0 // pred_check
    _
  $region23: #{tpu_custom_call.1} parent=0 // pred_check_branch
    %1394 = sbr.rel (0) target = $region25
  $region24: #{tpu_custom_call.1} parent=0 // pred_region
    _
  $region25: #{tpu_custom_call.1} parent=0 // pred_fallthru
    _
  // Predicated region
  $region26: #{tpu_custom_call.1} parent=0 // pred_check
    _
  $region27: #{tpu_custom_call.1} parent=0 // pred_check_branch
    %1396 = sbr.rel (0) target = $region29
  $region28: #{tpu_custom_call.1} parent=0 // pred_region
    _
  $region29: #{tpu_custom_call.1} parent=0 // pred_fallthru
    _
  // Predicated region
  $region30: #{tpu_custom_call.1} parent=0 // pred_check
    _
  $region31: #{tpu_custom_call.1} parent=0 // pred_check_branch
    %1398 = sbr.rel (0) target = $region33
  $region32: #{tpu_custom_call.1} parent=0 // pred_region
    _
  $region33: #{tpu_custom_call.1} parent=0 // pred_fallthru
    _
  // Predicated region
  $region34: #{tpu_custom_call.1} parent=0 // pred_check
    _
  $region35: #{tpu_custom_call.1} parent=0 // pred_check_branch
    %1400 = sbr.rel (0) target = $region37
  $region36: #{tpu_custom_call.1} parent=0 // pred_region
    _
  $region37: #{tpu_custom_call.1} parent=0 // pred_fallthru
    _

</llo_original>
